<compile_context>
chip_gen: v6e
topology: v6e:2x2x1
jax: 0.10.0
libtpu: 0.0.40
codegen_flags: <defaults>
</compile_context>

<pallas_src>
import functools
import math

import jax
import jax.numpy as jnp
import numpy as np
from jax.experimental import pallas as pl
from jax.experimental.pallas import tpu as pltpu


# ---------------------------------------------------------------------------
# Kernel
# ---------------------------------------------------------------------------
def _cross_attention_kernel(
    img_ref, dep_ref,
    wqi_ref, bqi_ref, wqd_ref, bqd_ref,
    wkv_d_ref, bkv_d_ref, wkv_i_ref, bkv_i_ref,
    wf1_ref, wf2_ref, bf_ref,
    g_img_ref, be_img_ref, g_dep_ref, be_dep_ref,
    g_img_q_ref, be_img_q_ref, g_dep_q_ref, be_dep_q_ref,
    out_ref,
    k_dep_s, v_dep_s, k_img_s, v_img_s,
    *, d_attn, d_pad_attn, q_tile, approx_recip,
):
    cdt = img_ref.dtype                     # MXU input dtype (bf16 or f32)
    inv_d = 1.0 / float(d_attn)             # true (unpadded) feature width

    def layernorm(a, g, b):
        # torch.nn.LayerNorm (biased variance, eps=1e-5).  Padding-safe: padded
        # lanes of `a` are exactly 0 (zero-padded weights/bias), so full-lane
        # sums divided by the true d_attn give correct moments without masks;
        # gamma/beta are zero in padded lanes so those lanes stay 0 afterwards.
        mu = jnp.sum(a, axis=-1, keepdims=True) * inv_d
        ex2 = jnp.sum(a * a, axis=-1, keepdims=True) * inv_d
        var = ex2 - mu * mu
        return (a - mu) * jax.lax.rsqrt(var + 1e-5) * g + b

    q_idx = pl.program_id(1)

    # ---- K/V side: computed ONCE per batch (q axis is "arbitrary" -> sequential),
    #      fused K|V weight matmul per side, result stashed in VMEM scratch.
    @pl.when(q_idx == 0)
    def _():
        kv_d = (jnp.dot(dep_ref[...], wkv_d_ref[...],
                        preferred_element_type=jnp.float32) + bkv_d_ref[...])
        k_dep_s[...] = layernorm(kv_d[:, :d_pad_attn],
                                 g_dep_ref[...], be_dep_ref[...]).astype(cdt)
        v_dep_s[...] = kv_d[:, d_pad_attn:].astype(cdt)

        kv_i = (jnp.dot(img_ref[...], wkv_i_ref[...],
                        preferred_element_type=jnp.float32) + bkv_i_ref[...])
        k_img_s[...] = layernorm(kv_i[:, :d_pad_attn],
                                 g_img_ref[...], be_img_ref[...]).astype(cdt)
        v_img_s[...] = kv_i[:, d_pad_attn:].astype(cdt)

    # ---- Q side: slice the query tile out of the already-resident full-S slabs
    #      (no duplicated Q-tile DMA).  1/sqrt(d_attn) is pre-folded into the
    #      scaled LN gamma/beta copies (g_*_q / be_*_q).
    row0 = pl.multiple_of(q_idx * q_tile, q_tile)
    xq = img_ref[pl.ds(row0, q_tile), :]
    dq = dep_ref[pl.ds(row0, q_tile), :]

    q_img = layernorm(
        jnp.dot(xq, wqi_ref[...], preferred_element_type=jnp.float32) + bqi_ref[...],
        g_img_q_ref[...], be_img_q_ref[...])
    q_dep = layernorm(
        jnp.dot(dq, wqd_ref[...], preferred_element_type=jnp.float32) + bqd_ref[...],
        g_dep_q_ref[...], be_dep_q_ref[...])

    def attend(qm, k_s, v_s):
        # QK^T: contract the last axis of both operands directly (no k.T ->
        # no XLU transpose / relayout before the MXU).  Scale already in q.
        s = jax.lax.dot_general(
            qm.astype(cdt), k_s[...], (((1,), (1,)), ((), ())),
            preferred_element_type=jnp.float32)                 # (TQ, S) f32
        m = jnp.max(s, axis=-1, keepdims=True)
        e = jnp.exp(s - m)
        denom = jnp.sum(e, axis=-1, keepdims=True)
        # Normalize AFTER the PV matmul, on the (TQ, d_attn) tensor rather than
        # the (TQ, S) probabilities; reciprocal goes to the EUP when approx.
        o = jnp.dot(e.astype(cdt), v_s[...], preferred_element_type=jnp.float32)
        return o * pl.reciprocal(denom, approx=approx_recip)

    o1 = attend(q_img, k_dep_s, v_dep_s)   # image -> depth attention
    o2 = attend(q_dep, k_img_s, v_img_s)   # depth -> image attention

    # Final linear on concat([o1, o2], -1), expressed as a split matmul
    # (avoids a lane-axis concat); f32 accumulation, f32 bias.
    out = (jnp.dot(o1.astype(cdt), wf1_ref[...], preferred_element_type=jnp.float32)
           + jnp.dot(o2.astype(cdt), wf2_ref[...], preferred_element_type=jnp.float32)
           + bf_ref[...])
    out_ref[...] = out.astype(out_ref.dtype)


# ---------------------------------------------------------------------------
# Capability probe: single-buffered weights (pipeline_mode=pl.Buffered(1)).
# Only this tiny 8x128 probe has a broad except; the real kernel is compiled
# exactly once and never wrapped in a try/except.
# ---------------------------------------------------------------------------
_SINGLE_BUFFER_SUPPORTED = None


def _single_buffer_weights_supported():
    global _SINGLE_BUFFER_SUPPORTED
    if _SINGLE_BUFFER_SUPPORTED is not None:
        return _SINGLE_BUFFER_SUPPORTED

    def _probe_kernel(x_ref, o_ref):
        o_ref[...] = x_ref[...] + 1.0

    try:
        spec = pl.BlockSpec((8, 128), lambda i: (0, 0),
                            pipeline_mode=pl.Buffered(1))
        fn = pl.pallas_call(
            _probe_kernel,
            out_shape=jax.ShapeDtypeStruct((8, 128), jnp.float32),
            grid=(2,),
            in_specs=[spec],
            out_specs=pl.BlockSpec((8, 128), lambda i: (0, 0)),
        )
        out = jax.block_until_ready(fn(jnp.zeros((8, 128), jnp.float32)))
        _SINGLE_BUFFER_SUPPORTED = bool(np.allclose(np.asarray(out), 1.0))
    except Exception:
        _SINGLE_BUFFER_SUPPORTED = False
    return _SINGLE_BUFFER_SUPPORTED


# ---------------------------------------------------------------------------
# Wrapper
# ---------------------------------------------------------------------------
def _round_up(n, m):
    return ((n + m - 1) // m) * m


def _pad_last(a, target):
    pad = target - a.shape[-1]
    if pad == 0:
        return a
    cfg = [(0, 0)] * (a.ndim - 1) + [(0, pad)]
    return jnp.pad(a, cfg)


def cross_attention(image_embeddings, depth_embeddings, params, *,
                    compute_dtype=jnp.float32, q_tile=None):
    B, S, d_image = image_embeddings.shape
    _, _, d_depth = depth_embeddings.shape
    d_attn = params["W_Q_image"].shape[1]

    cdt = np.dtype(compute_dtype)
    # Lane-dense, 128-aligned feature dims (MXU + unmasked vst output stores).
    Dpi = _round_up(d_image, 128)
    Dpd = _round_up(d_depth, 128)
    Dpa = _round_up(d_attn, 128)

    # Generation-aware VMEM capacity (v5e/v6e: 128 MiB, v7x: 64 MiB).
    try:
        vmem_cap = int(pltpu.get_tpu_info().vmem_capacity_bytes)
    except Exception:
        vmem_cap = 64 << 20

    # Query tiling: bounds VMEM to TQ*S scores per branch instead of S*S.
    # Prefer multiples of 256 (fills the 256-row MXU on v6e/v7x); allow 512
    # when VMEM is plentiful (v5e/v6e).
    if q_tile is None:
        if S <= 256:
            q_tile = S
        else:
            prefs = ([512] if vmem_cap >= (96 << 20) else []) + [256, 128, 64, 32, 16, 8]
            q_tile = next((t for t in prefs if S % t == 0), S)
    if S % q_tile or (q_tile != S and q_tile % 8):
        raise ValueError("q_tile must divide S and be a multiple of 8 (or equal S)")

    img = _pad_last(image_embeddings, Dpi).astype(cdt)
    dep = _pad_last(depth_embeddings, Dpd).astype(cdt)

    scale = 1.0 / math.sqrt(float(d_attn))

    def pw(w, rows, cols):     # zero-pad a weight matrix, cast to compute dtype
        return jnp.pad(w, ((0, rows - w.shape[0]), (0, cols - w.shape[1]))).astype(cdt)

    def pv(v, cols):           # zero-pad a bias / LN param, keep f32
        return _pad_last(v.astype(jnp.float32), cols)

    # Fused K|V projection weights per side (one MXU launch, 2*Dpa-wide N).
    wkv_depth = jnp.concatenate(
        [pw(params["W_K_depth"], Dpd, Dpa), pw(params["W_V_depth"], Dpd, Dpa)], axis=-1)
    bkv_depth = jnp.concatenate(
        [pv(params["b_K_depth"], Dpa), pv(params["b_V_depth"], Dpa)], axis=-1)
    wkv_image = jnp.concatenate(
        [pw(params["W_K_image"], Dpi, Dpa), pw(params["W_V_image"], Dpi, Dpa)], axis=-1)
    bkv_image = jnp.concatenate(
        [pv(params["b_K_image"], Dpa), pv(params["b_V_image"], Dpa)], axis=-1)

    weight_args = [
        pw(params["W_Q_image"], Dpi, Dpa), pv(params["b_Q_image"], Dpa),
        pw(params["W_Q_depth"], Dpd, Dpa), pv(params["b_Q_depth"], Dpa),
        wkv_depth, bkv_depth,
        wkv_image, bkv_image,
        pw(params["W_final_1"], Dpa, Dpa), pw(params["W_final_2"], Dpa, Dpa),
        pv(params["b_final"], Dpa),
        # unscaled LN params (K path)
        pv(params["ln_image_g"], Dpa), pv(params["ln_image_b"], Dpa),
        pv(params["ln_depth_g"], Dpa), pv(params["ln_depth_b"], Dpa),
        # 1/sqrt(d_attn)-scaled copies (Q path)
        pv(params["ln_image_g"] * scale, Dpa), pv(params["ln_image_b"] * scale, Dpa),
        pv(params["ln_depth_g"] * scale, Dpa), pv(params["ln_depth_b"] * scale, Dpa),
    ]

    approx_recip = (cdt == jnp.bfloat16)   # exact reciprocal on the f32 path
    kernel = functools.partial(_cross_attention_kernel,
                               d_attn=d_attn, d_pad_attn=Dpa,
                               q_tile=q_tile, approx_recip=approx_recip)

    # Explicit, generation-aware VMEM budget: double-buffered slabs/output tiles,
    # hoisted K/V scratch, weights, f32 intermediates, capped at ~85% of capacity.
    weight_bytes = sum(int(np.prod(a.shape)) * a.dtype.itemsize for a in weight_args)
    itemsize = cdt.itemsize
    slab_bytes = 2 * S * (Dpi + Dpd) * itemsize
    out_bytes = 2 * q_tile * Dpa * itemsize
    kv_scratch_bytes = 4 * S * Dpa * itemsize
    f32_tmp_bytes = 4 * (2 * q_tile * S + 2 * S * (2 * Dpa) + 6 * q_tile * Dpa)
    est = slab_bytes + out_bytes + kv_scratch_bytes + 2 * weight_bytes + f32_tmp_bytes
    cap = int(0.85 * vmem_cap)
    vmem_limit = int(min(cap, max(32 << 20, 2 * est)))

    single_buf = _single_buffer_weights_supported()

    def const_spec(shape):
        nz = (0,) * len(shape)
        idx = lambda b, q, _nz=nz: _nz
        if single_buf:
            # constant index map -> never re-fetched; single buffer halves
            # the weights' VMEM footprint with zero perf cost.
            return pl.BlockSpec(shape, idx, pipeline_mode=pl.Buffered(1))
        return pl.BlockSpec(shape, idx)

    in_specs = [
        # full-sequence slabs, resident per batch; the Q tile is sliced out of
        # these inside the kernel (no duplicate Q-tile DMA).
        pl.BlockSpec((pl.Squeezed(), S, Dpi), lambda b, q: (b, 0, 0)),
        pl.BlockSpec((pl.Squeezed(), S, Dpd), lambda b, q: (b, 0, 0)),
    ] + [const_spec(a.shape) for a in weight_args]

    out_padded = pl.pallas_call(
        kernel,
        out_shape=jax.ShapeDtypeStruct((B, S, Dpa), cdt),
        grid=(B, S // q_tile),
        in_specs=in_specs,
        out_specs=pl.BlockSpec((pl.Squeezed(), q_tile, Dpa),
                               lambda b, q: (b, q, 0)),
        scratch_shapes=[pltpu.VMEM((S, Dpa), compute_dtype) for _ in range(4)],
        compiler_params=pltpu.CompilerParams(
            # batch axis "parallel" (megacore on v7x); q axis "arbitrary" so the
            # pl.when(q==0) K/V hoist sees sequential iterations per batch.
            dimension_semantics=("parallel", "arbitrary"),
            vmem_limit_bytes=vmem_limit),
    )(img, dep, *weight_args)

    return out_padded[:, :, :d_attn]


# ---------------------------------------------------------------------------
# Parameters (xavier-uniform weights, zero biases, default LayerNorm) + reference
# ---------------------------------------------------------------------------
def init_params(key, d_image, d_depth, d_attn):
    def xavier(key, fan_in, fan_out):
        limit = math.sqrt(6.0 / (fan_in + fan_out))
        # stored as (fan_in, fan_out) so the kernel does x @ W (torch Linear is x @ W.T)
        return jax.random.uniform(key, (fan_in, fan_out), jnp.float32, -limit, limit)

    keys = jax.random.split(key, 7)
    p = {
        "W_Q_image": xavier(keys[0], d_image, d_attn), "b_Q_image": jnp.zeros((1, d_attn), jnp.float32),
        "W_K_depth": xavier(keys[1], d_depth, d_attn), "b_K_depth": jnp.zeros((1, d_attn), jnp.float32),
        "W_V_depth": xavier(keys[2], d_depth, d_attn), "b_V_depth": jnp.zeros((1, d_attn), jnp.float32),
        "W_Q_depth": xavier(keys[3], d_depth, d_attn), "b_Q_depth": jnp.zeros((1, d_attn), jnp.float32),
        "W_K_image": xavier(keys[4], d_image, d_attn), "b_K_image": jnp.zeros((1, d_attn), jnp.float32),
        "W_V_image": xavier(keys[5], d_image, d_attn), "b_V_image": jnp.zeros((1, d_attn), jnp.float32),
        "ln_image_g": jnp.ones((1, d_attn), jnp.float32), "ln_image_b": jnp.zeros((1, d_attn), jnp.float32),
        "ln_depth_g": jnp.ones((1, d_attn), jnp.float32), "ln_depth_b": jnp.zeros((1, d_attn), jnp.float32),
    }
    w_final = xavier(keys[6], 2 * d_attn, d_attn)
    p["W_final_1"] = w_final[:d_attn]   # multiplies output_image_to_depth
    p["W_final_2"] = w_final[d_attn:]   # multiplies output_depth_to_image
    p["b_final"] = jnp.zeros((1, d_attn), jnp.float32)
    return p


def cross_attention_ref(img, dep, p):
    """Pure-JAX f32 reference of the PyTorch forward (eval mode)."""
    def ln(a, g, b):
        mu = jnp.mean(a, -1, keepdims=True)
        var = jnp.mean((a - mu) ** 2, -1, keepdims=True)
        return (a - mu) / jnp.sqrt(var + 1e-5) * g + b

    d_attn = p["W_Q_image"].shape[1]
    qi = ln(img @ p["W_Q_image"] + p["b_Q_image"], p["ln_image_g"], p["ln_image_b"])
    kd = ln(dep @ p["W_K_depth"] + p["b_K_depth"], p["ln_depth_g"], p["ln_depth_b"])
    vd = dep @ p["W_V_depth"] + p["b_V_depth"]
    o1 = jax.nn.softmax(jnp.einsum("bqd,bkd->bqk", qi, kd) / math.sqrt(d_attn), -1) @ vd
    qd = ln(dep @ p["W_Q_depth"] + p["b_Q_depth"], p["ln_depth_g"], p["ln_depth_b"])
    ki = ln(img @ p["W_K_image"] + p["b_K_image"], p["ln_image_g"], p["ln_image_b"])
    vi = img @ p["W_V_image"] + p["b_V_image"]
    o2 = jax.nn.softmax(jnp.einsum("bqd,bkd->bqk", qd, ki) / math.sqrt(d_attn), -1) @ vi
    return o1 @ p["W_final_1"] + o2 @ p["W_final_2"] + p["b_final"]


if __name__ == "__main__":
    B, S = 2, 8
    d_image, d_depth, d_attn = 32, 16, 32

    key = jax.random.PRNGKey(0)
    k_img, k_dep, k_par = jax.random.split(key, 3)
    image_embeddings = jax.random.normal(k_img, (B, S, d_image), jnp.float32)
    depth_embeddings = jax.random.normal(k_dep, (B, S, d_depth), jnp.float32)
    params = init_params(k_par, d_image, d_depth, d_attn)

    ref = cross_attention_ref(image_embeddings, depth_embeddings, params)

    # f32 path (exact reciprocal): tight correctness check.
    out_f32 = jax.block_until_ready(
        cross_attention(image_embeddings, depth_embeddings, params,
                        compute_dtype=jnp.float32))
    np.testing.assert_allclose(np.asarray(out_f32), np.asarray(ref),
                               rtol=1e-4, atol=1e-4)

    # bf16 perf path (bf16 MXU inputs, f32 accumulation, approx EUP reciprocal).
    out_bf16 = jax.block_until_ready(
        cross_attention(image_embeddings, depth_embeddings, params,
                        compute_dtype=jnp.bfloat16))
    np.testing.assert_allclose(np.asarray(out_bf16.astype(jnp.float32)),
                               np.asarray(ref), rtol=0.1, atol=0.1)

    print("KERNEL_OK")
</pallas_src>

<mosaic_0001>
module attributes {stable_mosaic.version = 11 : i64} {
  func.func @_probe_kernel(%arg0: i32, %arg1: memref<8x128xf32, #tpu.memory_space<vmem>>, %arg2: memref<8x128xf32, #tpu.memory_space<vmem>>) attributes {dimension_semantics = [#tpu.dimension_semantics<arbitrary>], iteration_bounds = array<i64: 2>, scalar_prefetch = 0 : i64, scratch_operands = 0 : i64, tpu.core_type = #tpu.core_type<tc>, window_params = [{pipeline_mode = #tpu.pipeline_mode<synchronous>, transform_indices = @transform_0, window_bounds = array<i64: 8, 128>}, {pipeline_mode = #tpu.pipeline_mode<synchronous>, transform_indices = @transform_1, window_bounds = array<i64: 8, 128>}]} {
    %c0 = arith.constant 0 : index
    %c0_0 = arith.constant 0 : index
    %0 = vector.load %arg1[%c0, %c0_0] : memref<8x128xf32, #tpu.memory_space<vmem>>, vector<8x128xf32>
    %cst = arith.constant 1.000000e+00 : f32
    %1 = vector.broadcast %cst : f32 to vector<8x128xf32>
    %2 = arith.addf %0, %1 : vector<8x128xf32>
    %c0_1 = arith.constant 0 : index
    %c0_2 = arith.constant 0 : index
    %3 = vector.load %arg2[%c0_1, %c0_2] : memref<8x128xf32, #tpu.memory_space<vmem>>, vector<8x128xf32>
    tpu.vector_store %arg2[%c0_1, %c0_2], %2 {strides = array<i32>} : memref<8x128xf32, #tpu.memory_space<vmem>>, vector<8x128xf32>,
    return
  }
  func.func @transform_0(%arg0: i32) -> (i32, i32) {
    %c0_i32 = arith.constant 0 : i32
    %c0_i32_0 = arith.constant 0 : i32
    %c0_i32_1 = arith.constant 0 : i32
    return %c0_i32, %c0_i32_0 : i32, i32
  }
  func.func @transform_1(%arg0: i32) -> (i32, i32) {
    %c0_i32 = arith.constant 0 : i32
    %c0_i32_0 = arith.constant 0 : i32
    %c0_i32_1 = arith.constant 0 : i32
    return %c0_i32, %c0_i32_0 : i32, i32
  }
}

module attributes {stable_mosaic.version = 11 : i64} {
  func.func @_cross_attention_kernel(%arg0: i32, %arg1: i32, %arg2: memref<1x8x128xf32, #tpu.memory_space<vmem>>, %arg3: memref<1x8x128xf32, #tpu.memory_space<vmem>>, %arg4: memref<128x128xf32, #tpu.memory_space<vmem>>, %arg5: memref<1x128xf32, #tpu.memory_space<vmem>>, %arg6: memref<128x128xf32, #tpu.memory_space<vmem>>, %arg7: memref<1x128xf32, #tpu.memory_space<vmem>>, %arg8: memref<128x256xf32, #tpu.memory_space<vmem>>, %arg9: memref<1x256xf32, #tpu.memory_space<vmem>>, %arg10: memref<128x256xf32, #tpu.memory_space<vmem>>, %arg11: memref<1x256xf32, #tpu.memory_space<vmem>>, %arg12: memref<128x128xf32, #tpu.memory_space<vmem>>, %arg13: memref<128x128xf32, #tpu.memory_space<vmem>>, %arg14: memref<1x128xf32, #tpu.memory_space<vmem>>, %arg15: memref<1x128xf32, #tpu.memory_space<vmem>>, %arg16: memref<1x128xf32, #tpu.memory_space<vmem>>, %arg17: memref<1x128xf32, #tpu.memory_space<vmem>>, %arg18: memref<1x128xf32, #tpu.memory_space<vmem>>, %arg19: memref<1x128xf32, #tpu.memory_space<vmem>>, %arg20: memref<1x128xf32, #tpu.memory_space<vmem>>, %arg21: memref<1x128xf32, #tpu.memory_space<vmem>>, %arg22: memref<1x128xf32, #tpu.memory_space<vmem>>, %arg23: memref<1x8x128xf32, #tpu.memory_space<vmem>>, %arg24: memref<8x128xf32, #tpu.memory_space<vmem>>, %arg25: memref<8x128xf32, #tpu.memory_space<vmem>>, %arg26: memref<8x128xf32, #tpu.memory_space<vmem>>, %arg27: memref<8x128xf32, #tpu.memory_space<vmem>>) attributes {dimension_semantics = [#tpu.dimension_semantics<parallel>, #tpu.dimension_semantics<arbitrary>], iteration_bounds = array<i64: 2, 1>, scalar_prefetch = 0 : i64, scratch_operands = 4 : i64, tpu.core_type = #tpu.core_type<tc>, window_params = [{transform_indices = @transform_0, window_bounds = array<i64: 1, 8, 128>}, {transform_indices = @transform_1, window_bounds = array<i64: 1, 8, 128>}, {pipeline_mode = #tpu.pipeline_mode<synchronous>, transform_indices = @transform_2, window_bounds = array<i64: 128, 128>}, {pipeline_mode = #tpu.pipeline_mode<synchronous>, transform_indices = @transform_3, window_bounds = array<i64: 1, 128>}, {pipeline_mode = #tpu.pipeline_mode<synchronous>, transform_indices = @transform_4, window_bounds = array<i64: 128, 128>}, {pipeline_mode = #tpu.pipeline_mode<synchronous>, transform_indices = @transform_5, window_bounds = array<i64: 1, 128>}, {pipeline_mode = #tpu.pipeline_mode<synchronous>, transform_indices = @transform_6, window_bounds = array<i64: 128, 256>}, {pipeline_mode = #tpu.pipeline_mode<synchronous>, transform_indices = @transform_7, window_bounds = array<i64: 1, 256>}, {pipeline_mode = #tpu.pipeline_mode<synchronous>, transform_indices = @transform_8, window_bounds = array<i64: 128, 256>}, {pipeline_mode = #tpu.pipeline_mode<synchronous>, transform_indices = @transform_9, window_bounds = array<i64: 1, 256>}, {pipeline_mode = #tpu.pipeline_mode<synchronous>, transform_indices = @transform_10, window_bounds = array<i64: 128, 128>}, {pipeline_mode = #tpu.pipeline_mode<synchronous>, transform_indices = @transform_11, window_bounds = array<i64: 128, 128>}, {pipeline_mode = #tpu.pipeline_mode<synchronous>, transform_indices = @transform_12, window_bounds = array<i64: 1, 128>}, {pipeline_mode = #tpu.pipeline_mode<synchronous>, transform_indices = @transform_13, window_bounds = array<i64: 1, 128>}, {pipeline_mode = #tpu.pipeline_mode<synchronous>, transform_indices = @transform_14, window_bounds = array<i64: 1, 128>}, {pipeline_mode = #tpu.pipeline_mode<synchronous>, transform_indices = @transform_15, window_bounds = array<i64: 1, 128>}, {pipeline_mode = #tpu.pipeline_mode<synchronous>, transform_indices = @transform_16, window_bounds = array<i64: 1, 128>}, {pipeline_mode = #tpu.pipeline_mode<synchronous>, transform_indices = @transform_17, window_bounds = array<i64: 1, 128>}, {pipeline_mode = #tpu.pipeline_mode<synchronous>, transform_indices = @transform_18, window_bounds = array<i64: 1, 128>}, {pipeline_mode = #tpu.pipeline_mode<synchronous>, transform_indices = @transform_19, window_bounds = array<i64: 1, 128>}, {pipeline_mode = #tpu.pipeline_mode<synchronous>, transform_indices = @transform_20, window_bounds = array<i64: 1, 128>}, {transform_indices = @transform_21, window_bounds = array<i64: 1, 8, 128>}]} {
    %c0_i32 = arith.constant 0 : i32
    %0 = arith.cmpi eq, %arg1, %c0_i32 : i32
    %1 = arith.extui %0 : i1 to i32
    %c0_i32_0 = arith.constant 0 : i32
    %2 = arith.cmpi ne, %1, %c0_i32_0 : i32
    scf.if %2 {
      %c0_58 = arith.constant 0 : index
      %c0_59 = arith.constant 0 : index
      %c0_60 = arith.constant 0 : index
      %108 = vector.load %arg3[%c0_58, %c0_59, %c0_60] : memref<1x8x128xf32, #tpu.memory_space<vmem>>, vector<1x8x128xf32>
      %109 = vector.shape_cast %108 : vector<1x8x128xf32> to vector<8x128xf32>
      %c0_61 = arith.constant 0 : index
      %c0_62 = arith.constant 0 : index
      %110 = vector.load %arg8[%c0_61, %c0_62] : memref<128x256xf32, #tpu.memory_space<vmem>>, vector<128x256xf32>
      %cst_63 = arith.constant dense<0.000000e+00> : vector<8x256xf32>
      %111 = tpu.matmul %109, %110, %cst_63 {dimension_numbers = #tpu.dot_dimension_numbers<[1], [0], [0], [1], [0, 0, 1, 1], [], []>} : vector<8x128xf32>, vector<128x256xf32>, vector<8x256xf32> -> vector<8x256xf32>
      %c0_64 = arith.constant 0 : index
      %c0_65 = arith.constant 0 : index
      %112 = vector.load %arg9[%c0_64, %c0_65] : memref<1x256xf32, #tpu.memory_space<vmem>>, vector<1x256xf32>
      %113 = vector.broadcast %112 : vector<1x256xf32> to vector<8x256xf32>
      %114 = arith.addf %111, %113 : vector<8x256xf32>
      %115 = vector.extract_strided_slice %114 {offsets = [0, 0], sizes = [8, 128], strides = [1, 1]} : vector<8x256xf32> to vector<8x128xf32>
      %c0_66 = arith.constant 0 : index
      %c0_67 = arith.constant 0 : index
      %116 = vector.load %arg17[%c0_66, %c0_67] : memref<1x128xf32, #tpu.memory_space<vmem>>, vector<1x128xf32>
      %c0_68 = arith.constant 0 : index
      %c0_69 = arith.constant 0 : index
      %117 = vector.load %arg18[%c0_68, %c0_69] : memref<1x128xf32, #tpu.memory_space<vmem>>, vector<1x128xf32>
      %cst_70 = arith.constant dense<0.000000e+00> : vector<8xf32>
      %118 = vector.multi_reduction <add>, %115, %cst_70 [1] : vector<8x128xf32> to vector<8xf32>
      %119 = vector.shape_cast %118 : vector<8xf32> to vector<8x1xf32>
      %cst_71 = arith.constant 3.125000e-02 : f32
      %120 = vector.broadcast %cst_71 : f32 to vector<8x1xf32>
      %121 = arith.mulf %119, %120 : vector<8x1xf32>
      %122 = arith.mulf %115, %115 : vector<8x128xf32>
      %cst_72 = arith.constant dense<0.000000e+00> : vector<8xf32>
      %123 = vector.multi_reduction <add>, %122, %cst_72 [1] : vector<8x128xf32> to vector<8xf32>
      %124 = vector.shape_cast %123 : vector<8xf32> to vector<8x1xf32>
      %cst_73 = arith.constant 3.125000e-02 : f32
      %125 = vector.broadcast %cst_73 : f32 to vector<8x1xf32>
      %126 = arith.mulf %124, %125 : vector<8x1xf32>
      %127 = arith.mulf %121, %121 : vector<8x1xf32>
      %128 = arith.subf %126, %127 : vector<8x1xf32>
      %129 = vector.broadcast %121 : vector<8x1xf32> to vector<8x128xf32>
      %130 = arith.subf %115, %129 : vector<8x128xf32>
      %cst_74 = arith.constant 9.99999974E-6 : f32
      %131 = vector.broadcast %cst_74 : f32 to vector<8x1xf32>
      %132 = arith.addf %128, %131 : vector<8x1xf32>
      %133 = math.rsqrt %132 : vector<8x1xf32>
      %134 = vector.broadcast %133 : vector<8x1xf32> to vector<8x128xf32>
      %135 = arith.mulf %130, %134 : vector<8x128xf32>
      %136 = vector.broadcast %116 : vector<1x128xf32> to vector<8x128xf32>
      %137 = arith.mulf %135, %136 : vector<8x128xf32>
      %138 = vector.broadcast %117 : vector<1x128xf32> to vector<8x128xf32>
      %139 = arith.addf %137, %138 : vector<8x128xf32>
      %c0_75 = arith.constant 0 : index
      %c0_76 = arith.constant 0 : index
      %140 = vector.load %arg24[%c0_75, %c0_76] : memref<8x128xf32, #tpu.memory_space<vmem>>, vector<8x128xf32>
      tpu.vector_store %arg24[%c0_75, %c0_76], %139 {strides = array<i32>} : memref<8x128xf32, #tpu.memory_space<vmem>>, vector<8x128xf32>,
      %141 = vector.extract_strided_slice %114 {offsets = [0, 128], sizes = [8, 128], strides = [1, 1]} : vector<8x256xf32> to vector<8x128xf32>
      %c0_77 = arith.constant 0 : index
      %c0_78 = arith.constant 0 : index
      %142 = vector.load %arg25[%c0_77, %c0_78] : memref<8x128xf32, #tpu.memory_space<vmem>>, vector<8x128xf32>
      tpu.vector_store %arg25[%c0_77, %c0_78], %141 {strides = array<i32>} : memref<8x128xf32, #tpu.memory_space<vmem>>, vector<8x128xf32>,
      %c0_79 = arith.constant 0 : index
      %c0_80 = arith.constant 0 : index
      %c0_81 = arith.constant 0 : index
      %143 = vector.load %arg2[%c0_79, %c0_80, %c0_81] : memref<1x8x128xf32, #tpu.memory_space<vmem>>, vector<1x8x128xf32>
      %144 = vector.shape_cast %143 : vector<1x8x128xf32> to vector<8x128xf32>
      %c0_82 = arith.constant 0 : index
      %c0_83 = arith.constant 0 : index
      %145 = vector.load %arg10[%c0_82, %c0_83] : memref<128x256xf32, #tpu.memory_space<vmem>>, vector<128x256xf32>
      %cst_84 = arith.constant dense<0.000000e+00> : vector<8x256xf32>
      %146 = tpu.matmul %144, %145, %cst_84 {dimension_numbers = #tpu.dot_dimension_numbers<[1], [0], [0], [1], [0, 0, 1, 1], [], []>} : vector<8x128xf32>, vector<128x256xf32>, vector<8x256xf32> -> vector<8x256xf32>
      %c0_85 = arith.constant 0 : index
      %c0_86 = arith.constant 0 : index
      %147 = vector.load %arg11[%c0_85, %c0_86] : memref<1x256xf32, #tpu.memory_space<vmem>>, vector<1x256xf32>
      %148 = vector.broadcast %147 : vector<1x256xf32> to vector<8x256xf32>
      %149 = arith.addf %146, %148 : vector<8x256xf32>
      %150 = vector.extract_strided_slice %149 {offsets = [0, 0], sizes = [8, 128], strides = [1, 1]} : vector<8x256xf32> to vector<8x128xf32>
      %c0_87 = arith.constant 0 : index
      %c0_88 = arith.constant 0 : index
      %151 = vector.load %arg15[%c0_87, %c0_88] : memref<1x128xf32, #tpu.memory_space<vmem>>, vector<1x128xf32>
      %c0_89 = arith.constant 0 : index
      %c0_90 = arith.constant 0 : index
      %152 = vector.load %arg16[%c0_89, %c0_90] : memref<1x128xf32, #tpu.memory_space<vmem>>, vector<1x128xf32>
      %cst_91 = arith.constant dense<0.000000e+00> : vector<8xf32>
      %153 = vector.multi_reduction <add>, %150, %cst_91 [1] : vector<8x128xf32> to vector<8xf32>
      %154 = vector.shape_cast %153 : vector<8xf32> to vector<8x1xf32>
      %cst_92 = arith.constant 3.125000e-02 : f32
      %155 = vector.broadcast %cst_92 : f32 to vector<8x1xf32>
      %156 = arith.mulf %154, %155 : vector<8x1xf32>
      %157 = arith.mulf %150, %150 : vector<8x128xf32>
      %cst_93 = arith.constant dense<0.000000e+00> : vector<8xf32>
      %158 = vector.multi_reduction <add>, %157, %cst_93 [1] : vector<8x128xf32> to vector<8xf32>
      %159 = vector.shape_cast %158 : vector<8xf32> to vector<8x1xf32>
      %cst_94 = arith.constant 3.125000e-02 : f32
      %160 = vector.broadcast %cst_94 : f32 to vector<8x1xf32>
      %161 = arith.mulf %159, %160 : vector<8x1xf32>
      %162 = arith.mulf %156, %156 : vector<8x1xf32>
      %163 = arith.subf %161, %162 : vector<8x1xf32>
      %164 = vector.broadcast %156 : vector<8x1xf32> to vector<8x128xf32>
      %165 = arith.subf %150, %164 : vector<8x128xf32>
      %cst_95 = arith.constant 9.99999974E-6 : f32
      %166 = vector.broadcast %cst_95 : f32 to vector<8x1xf32>
      %167 = arith.addf %163, %166 : vector<8x1xf32>
      %168 = math.rsqrt %167 : vector<8x1xf32>
      %169 = vector.broadcast %168 : vector<8x1xf32> to vector<8x128xf32>
      %170 = arith.mulf %165, %169 : vector<8x128xf32>
      %171 = vector.broadcast %151 : vector<1x128xf32> to vector<8x128xf32>
      %172 = arith.mulf %170, %171 : vector<8x128xf32>
      %173 = vector.broadcast %152 : vector<1x128xf32> to vector<8x128xf32>
      %174 = arith.addf %172, %173 : vector<8x128xf32>
      %c0_96 = arith.constant 0 : index
      %c0_97 = arith.constant 0 : index
      %175 = vector.load %arg26[%c0_96, %c0_97] : memref<8x128xf32, #tpu.memory_space<vmem>>, vector<8x128xf32>
      tpu.vector_store %arg26[%c0_96, %c0_97], %174 {strides = array<i32>} : memref<8x128xf32, #tpu.memory_space<vmem>>, vector<8x128xf32>,
      %176 = vector.extract_strided_slice %149 {offsets = [0, 128], sizes = [8, 128], strides = [1, 1]} : vector<8x256xf32> to vector<8x128xf32>
      %c0_98 = arith.constant 0 : index
      %c0_99 = arith.constant 0 : index
      %177 = vector.load %arg27[%c0_98, %c0_99] : memref<8x128xf32, #tpu.memory_space<vmem>>, vector<8x128xf32>
      tpu.vector_store %arg27[%c0_98, %c0_99], %176 {strides = array<i32>} : memref<8x128xf32, #tpu.memory_space<vmem>>, vector<8x128xf32>,
    } else {
    }
    %c8_i32 = arith.constant 8 : i32
    %3 = arith.muli %arg1, %c8_i32 : i32
    %4 = tpu.assume_multiple %3, 8 : i32
    %c0 = arith.constant 0 : index
    %5 = arith.index_cast %4 : i32 to index
    %c0_1 = arith.constant 0 : index
    %6 = vector.load %arg2[%c0, %5, %c0_1] : memref<1x8x128xf32, #tpu.memory_space<vmem>>, vector<1x8x128xf32>
    %7 = vector.shape_cast %6 : vector<1x8x128xf32> to vector<8x128xf32>
    %c0_2 = arith.constant 0 : index
    %8 = arith.index_cast %4 : i32 to index
    %c0_3 = arith.constant 0 : index
    %9 = vector.load %arg3[%c0_2, %8, %c0_3] : memref<1x8x128xf32, #tpu.memory_space<vmem>>, vector<1x8x128xf32>
    %10 = vector.shape_cast %9 : vector<1x8x128xf32> to vector<8x128xf32>
    %c0_4 = arith.constant 0 : index
    %c0_5 = arith.constant 0 : index
    %11 = vector.load %arg4[%c0_4, %c0_5] : memref<128x128xf32, #tpu.memory_space<vmem>>, vector<128x128xf32>
    %cst = arith.constant dense<0.000000e+00> : vector<8x128xf32>
    %12 = tpu.matmul %7, %11, %cst {dimension_numbers = #tpu.dot_dimension_numbers<[1], [0], [0], [1], [0, 0, 1, 1], [], []>} : vector<8x128xf32>, vector<128x128xf32>, vector<8x128xf32> -> vector<8x128xf32>
    %c0_6 = arith.constant 0 : index
    %c0_7 = arith.constant 0 : index
    %13 = vector.load %arg5[%c0_6, %c0_7] : memref<1x128xf32, #tpu.memory_space<vmem>>, vector<1x128xf32>
    %14 = vector.broadcast %13 : vector<1x128xf32> to vector<8x128xf32>
    %15 = arith.addf %12, %14 : vector<8x128xf32>
    %c0_8 = arith.constant 0 : index
    %c0_9 = arith.constant 0 : index
    %16 = vector.load %arg19[%c0_8, %c0_9] : memref<1x128xf32, #tpu.memory_space<vmem>>, vector<1x128xf32>
    %c0_10 = arith.constant 0 : index
    %c0_11 = arith.constant 0 : index
    %17 = vector.load %arg20[%c0_10, %c0_11] : memref<1x128xf32, #tpu.memory_space<vmem>>, vector<1x128xf32>
    %cst_12 = arith.constant dense<0.000000e+00> : vector<8xf32>
    %18 = vector.multi_reduction <add>, %15, %cst_12 [1] : vector<8x128xf32> to vector<8xf32>
    %19 = vector.shape_cast %18 : vector<8xf32> to vector<8x1xf32>
    %cst_13 = arith.constant 3.125000e-02 : f32
    %20 = vector.broadcast %cst_13 : f32 to vector<8x1xf32>
    %21 = arith.mulf %19, %20 : vector<8x1xf32>
    %22 = arith.mulf %15, %15 : vector<8x128xf32>
    %cst_14 = arith.constant dense<0.000000e+00> : vector<8xf32>
    %23 = vector.multi_reduction <add>, %22, %cst_14 [1] : vector<8x128xf32> to vector<8xf32>
    %24 = vector.shape_cast %23 : vector<8xf32> to vector<8x1xf32>
    %cst_15 = arith.constant 3.125000e-02 : f32
    %25 = vector.broadcast %cst_15 : f32 to vector<8x1xf32>
    %26 = arith.mulf %24, %25 : vector<8x1xf32>
    %27 = arith.mulf %21, %21 : vector<8x1xf32>
    %28 = arith.subf %26, %27 : vector<8x1xf32>
    %29 = vector.broadcast %21 : vector<8x1xf32> to vector<8x128xf32>
    %30 = arith.subf %15, %29 : vector<8x128xf32>
    %cst_16 = arith.constant 9.99999974E-6 : f32
    %31 = vector.broadcast %cst_16 : f32 to vector<8x1xf32>
    %32 = arith.addf %28, %31 : vector<8x1xf32>
    %33 = math.rsqrt %32 : vector<8x1xf32>
    %34 = vector.broadcast %33 : vector<8x1xf32> to vector<8x128xf32>
    %35 = arith.mulf %30, %34 : vector<8x128xf32>
    %36 = vector.broadcast %16 : vector<1x128xf32> to vector<8x128xf32>
    %37 = arith.mulf %35, %36 : vector<8x128xf32>
    %38 = vector.broadcast %17 : vector<1x128xf32> to vector<8x128xf32>
    %39 = arith.addf %37, %38 : vector<8x128xf32>
    %c0_17 = arith.constant 0 : index
    %c0_18 = arith.constant 0 : index
    %40 = vector.load %arg6[%c0_17, %c0_18] : memref<128x128xf32, #tpu.memory_space<vmem>>, vector<128x128xf32>
    %cst_19 = arith.constant dense<0.000000e+00> : vector<8x128xf32>
    %41 = tpu.matmul %10, %40, %cst_19 {dimension_numbers = #tpu.dot_dimension_numbers<[1], [0], [0], [1], [0, 0, 1, 1], [], []>} : vector<8x128xf32>, vector<128x128xf32>, vector<8x128xf32> -> vector<8x128xf32>
    %c0_20 = arith.constant 0 : index
    %c0_21 = arith.constant 0 : index
    %42 = vector.load %arg7[%c0_20, %c0_21] : memref<1x128xf32, #tpu.memory_space<vmem>>, vector<1x128xf32>
    %43 = vector.broadcast %42 : vector<1x128xf32> to vector<8x128xf32>
    %44 = arith.addf %41, %43 : vector<8x128xf32>
    %c0_22 = arith.constant 0 : index
    %c0_23 = arith.constant 0 : index
    %45 = vector.load %arg21[%c0_22, %c0_23] : memref<1x128xf32, #tpu.memory_space<vmem>>, vector<1x128xf32>
    %c0_24 = arith.constant 0 : index
    %c0_25 = arith.constant 0 : index
    %46 = vector.load %arg22[%c0_24, %c0_25] : memref<1x128xf32, #tpu.memory_space<vmem>>, vector<1x128xf32>
    %cst_26 = arith.constant dense<0.000000e+00> : vector<8xf32>
    %47 = vector.multi_reduction <add>, %44, %cst_26 [1] : vector<8x128xf32> to vector<8xf32>
    %48 = vector.shape_cast %47 : vector<8xf32> to vector<8x1xf32>
    %cst_27 = arith.constant 3.125000e-02 : f32
    %49 = vector.broadcast %cst_27 : f32 to vector<8x1xf32>
    %50 = arith.mulf %48, %49 : vector<8x1xf32>
    %51 = arith.mulf %44, %44 : vector<8x128xf32>
    %cst_28 = arith.constant dense<0.000000e+00> : vector<8xf32>
    %52 = vector.multi_reduction <add>, %51, %cst_28 [1] : vector<8x128xf32> to vector<8xf32>
    %53 = vector.shape_cast %52 : vector<8xf32> to vector<8x1xf32>
    %cst_29 = arith.constant 3.125000e-02 : f32
    %54 = vector.broadcast %cst_29 : f32 to vector<8x1xf32>
    %55 = arith.mulf %53, %54 : vector<8x1xf32>
    %56 = arith.mulf %50, %50 : vector<8x1xf32>
    %57 = arith.subf %55, %56 : vector<8x1xf32>
    %58 = vector.broadcast %50 : vector<8x1xf32> to vector<8x128xf32>
    %59 = arith.subf %44, %58 : vector<8x128xf32>
    %cst_30 = arith.constant 9.99999974E-6 : f32
    %60 = vector.broadcast %cst_30 : f32 to vector<8x1xf32>
    %61 = arith.addf %57, %60 : vector<8x1xf32>
    %62 = math.rsqrt %61 : vector<8x1xf32>
    %63 = vector.broadcast %62 : vector<8x1xf32> to vector<8x128xf32>
    %64 = arith.mulf %59, %63 : vector<8x128xf32>
    %65 = vector.broadcast %45 : vector<1x128xf32> to vector<8x128xf32>
    %66 = arith.mulf %64, %65 : vector<8x128xf32>
    %67 = vector.broadcast %46 : vector<1x128xf32> to vector<8x128xf32>
    %68 = arith.addf %66, %67 : vector<8x128xf32>
    %c0_31 = arith.constant 0 : index
    %c0_32 = arith.constant 0 : index
    %69 = vector.load %arg24[%c0_31, %c0_32] : memref<8x128xf32, #tpu.memory_space<vmem>>, vector<8x128xf32>
    %cst_33 = arith.constant dense<0.000000e+00> : vector<8x8xf32>
    %70 = tpu.matmul %39, %69, %cst_33 {dimension_numbers = #tpu.dot_dimension_numbers<[1], [1], [0], [0], [0, 0, 1, 0], [], []>} : vector<8x128xf32>, vector<8x128xf32>, vector<8x8xf32> -> vector<8x8xf32>
    %cst_34 = arith.constant dense<0xFF800000> : vector<8xf32>
    %71 = vector.multi_reduction <maximumf>, %70, %cst_34 [1] : vector<8x8xf32> to vector<8xf32>
    %72 = vector.shape_cast %71 : vector<8xf32> to vector<8x1xf32>
    %73 = vector.broadcast %72 : vector<8x1xf32> to vector<8x8xf32>
    %74 = arith.subf %70, %73 : vector<8x8xf32>
    %75 = math.exp %74 : vector<8x8xf32>
    %cst_35 = arith.constant dense<0.000000e+00> : vector<8xf32>
    %76 = vector.multi_reduction <add>, %75, %cst_35 [1] : vector<8x8xf32> to vector<8xf32>
    %77 = vector.shape_cast %76 : vector<8xf32> to vector<8x1xf32>
    %c0_36 = arith.constant 0 : index
    %c0_37 = arith.constant 0 : index
    %78 = vector.load %arg25[%c0_36, %c0_37] : memref<8x128xf32, #tpu.memory_space<vmem>>, vector<8x128xf32>
    %cst_38 = arith.constant dense<0.000000e+00> : vector<8x128xf32>
    %79 = tpu.matmul %75, %78, %cst_38 {dimension_numbers = #tpu.dot_dimension_numbers<[1], [0], [0], [1], [0, 0, 1, 1], [], []>} : vector<8x8xf32>, vector<8x128xf32>, vector<8x128xf32> -> vector<8x128xf32>
    %80 = tpu.reciprocal %77 : vector<8x1xf32> -> vector<8x1xf32>
    %81 = vector.broadcast %80 : vector<8x1xf32> to vector<8x128xf32>
    %82 = arith.mulf %79, %81 : vector<8x128xf32>
    %c0_39 = arith.constant 0 : index
    %c0_40 = arith.constant 0 : index
    %83 = vector.load %arg26[%c0_39, %c0_40] : memref<8x128xf32, #tpu.memory_space<vmem>>, vector<8x128xf32>
    %cst_41 = arith.constant dense<0.000000e+00> : vector<8x8xf32>
    %84 = tpu.matmul %68, %83, %cst_41 {dimension_numbers = #tpu.dot_dimension_numbers<[1], [1], [0], [0], [0, 0, 1, 0], [], []>} : vector<8x128xf32>, vector<8x128xf32>, vector<8x8xf32> -> vector<8x8xf32>
    %cst_42 = arith.constant dense<0xFF800000> : vector<8xf32>
    %85 = vector.multi_reduction <maximumf>, %84, %cst_42 [1] : vector<8x8xf32> to vector<8xf32>
    %86 = vector.shape_cast %85 : vector<8xf32> to vector<8x1xf32>
    %87 = vector.broadcast %86 : vector<8x1xf32> to vector<8x8xf32>
    %88 = arith.subf %84, %87 : vector<8x8xf32>
    %89 = math.exp %88 : vector<8x8xf32>
    %cst_43 = arith.constant dense<0.000000e+00> : vector<8xf32>
    %90 = vector.multi_reduction <add>, %89, %cst_43 [1] : vector<8x8xf32> to vector<8xf32>
    %91 = vector.shape_cast %90 : vector<8xf32> to vector<8x1xf32>
    %c0_44 = arith.constant 0 : index
    %c0_45 = arith.constant 0 : index
    %92 = vector.load %arg27[%c0_44, %c0_45] : memref<8x128xf32, #tpu.memory_space<vmem>>, vector<8x128xf32>
    %cst_46 = arith.constant dense<0.000000e+00> : vector<8x128xf32>
    %93 = tpu.matmul %89, %92, %cst_46 {dimension_numbers = #tpu.dot_dimension_numbers<[1], [0], [0], [1], [0, 0, 1, 1], [], []>} : vector<8x8xf32>, vector<8x128xf32>, vector<8x128xf32> -> vector<8x128xf32>
    %94 = tpu.reciprocal %91 : vector<8x1xf32> -> vector<8x1xf32>
    %95 = vector.broadcast %94 : vector<8x1xf32> to vector<8x128xf32>
    %96 = arith.mulf %93, %95 : vector<8x128xf32>
    %c0_47 = arith.constant 0 : index
    %c0_48 = arith.constant 0 : index
    %97 = vector.load %arg12[%c0_47, %c0_48] : memref<128x128xf32, #tpu.memory_space<vmem>>, vector<128x128xf32>
    %cst_49 = arith.constant dense<0.000000e+00> : vector<8x128xf32>
    %98 = tpu.matmul %82, %97, %cst_49 {dimension_numbers = #tpu.dot_dimension_numbers<[1], [0], [0], [1], [0, 0, 1, 1], [], []>} : vector<8x128xf32>, vector<128x128xf32>, vector<8x128xf32> -> vector<8x128xf32>
    %c0_50 = arith.constant 0 : index
    %c0_51 = arith.constant 0 : index
    %99 = vector.load %arg13[%c0_50, %c0_51] : memref<128x128xf32, #tpu.memory_space<vmem>>, vector<128x128xf32>
    %cst_52 = arith.constant dense<0.000000e+00> : vector<8x128xf32>
    %100 = tpu.matmul %96, %99, %cst_52 {dimension_numbers = #tpu.dot_dimension_numbers<[1], [0], [0], [1], [0, 0, 1, 1], [], []>} : vector<8x128xf32>, vector<128x128xf32>, vector<8x128xf32> -> vector<8x128xf32>
    %101 = arith.addf %98, %100 : vector<8x128xf32>
    %c0_53 = arith.constant 0 : index
    %c0_54 = arith.constant 0 : index
    %102 = vector.load %arg14[%c0_53, %c0_54] : memref<1x128xf32, #tpu.memory_space<vmem>>, vector<1x128xf32>
    %103 = vector.broadcast %102 : vector<1x128xf32> to vector<8x128xf32>
    %104 = arith.addf %101, %103 : vector<8x128xf32>
    %c0_55 = arith.constant 0 : index
    %c0_56 = arith.constant 0 : index
    %c0_57 = arith.constant 0 : index
    %105 = vector.load %arg23[%c0_55, %c0_56, %c0_57] : memref<1x8x128xf32, #tpu.memory_space<vmem>>, vector<1x8x128xf32>
    %106 = vector.shape_cast %105 : vector<1x8x128xf32> to vector<8x128xf32>
    %107 = vector.shape_cast %104 : vector<8x128xf32> to vector<1x8x128xf32>
    tpu.vector_store %arg23[%c0_55, %c0_56, %c0_57], %107 {strides = array<i32>} : memref<1x8x128xf32, #tpu.memory_space<vmem>>, vector<1x8x128xf32>,
    return
  }
  func.func @transform_0(%arg0: i32, %arg1: i32) -> (i32, i32, i32) {
    %c0_i32 = arith.constant 0 : i32
    %c0_i32_0 = arith.constant 0 : i32
    %c0_i32_1 = arith.constant 0 : i32
    return %arg0, %c0_i32, %c0_i32_0 : i32, i32, i32
  }
  func.func @transform_1(%arg0: i32, %arg1: i32) -> (i32, i32, i32) {
    %c0_i32 = arith.constant 0 : i32
    %c0_i32_0 = arith.constant 0 : i32
    %c0_i32_1 = arith.constant 0 : i32
    return %arg0, %c0_i32, %c0_i32_0 : i32, i32, i32
  }
  func.func @transform_2(%arg0: i32, %arg1: i32) -> (i32, i32) {
    %c0_i32 = arith.constant 0 : i32
    %c0_i32_0 = arith.constant 0 : i32
    %c0_i32_1 = arith.constant 0 : i32
    return %c0_i32, %c0_i32_0 : i32, i32
  }
  func.func @transform_3(%arg0: i32, %arg1: i32) -> (i32, i32) {
    %c0_i32 = arith.constant 0 : i32
    %c0_i32_0 = arith.constant 0 : i32
    %c0_i32_1 = arith.constant 0 : i32
    return %c0_i32, %c0_i32_0 : i32, i32
  }
  func.func @transform_4(%arg0: i32, %arg1: i32) -> (i32, i32) {
    %c0_i32 = arith.constant 0 : i32
    %c0_i32_0 = arith.constant 0 : i32
    %c0_i32_1 = arith.constant 0 : i32
    return %c0_i32, %c0_i32_0 : i32, i32
  }
  func.func @transform_5(%arg0: i32, %arg1: i32) -> (i32, i32) {
    %c0_i32 = arith.constant 0 : i32
    %c0_i32_0 = arith.constant 0 : i32
    %c0_i32_1 = arith.constant 0 : i32
    return %c0_i32, %c0_i32_0 : i32, i32
  }
  func.func @transform_6(%arg0: i32, %arg1: i32) -> (i32, i32) {
    %c0_i32 = arith.constant 0 : i32
    %c0_i32_0 = arith.constant 0 : i32
    %c0_i32_1 = arith.constant 0 : i32
    return %c0_i32, %c0_i32_0 : i32, i32
  }
  func.func @transform_7(%arg0: i32, %arg1: i32) -> (i32, i32) {
    %c0_i32 = arith.constant 0 : i32
    %c0_i32_0 = arith.constant 0 : i32
    %c0_i32_1 = arith.constant 0 : i32
    return %c0_i32, %c0_i32_0 : i32, i32
  }
  func.func @transform_8(%arg0: i32, %arg1: i32) -> (i32, i32) {
    %c0_i32 = arith.constant 0 : i32
    %c0_i32_0 = arith.constant 0 : i32
    %c0_i32_1 = arith.constant 0 : i32
    return %c0_i32, %c0_i32_0 : i32, i32
  }
  func.func @transform_9(%arg0: i32, %arg1: i32) -> (i32, i32) {
    %c0_i32 = arith.constant 0 : i32
    %c0_i32_0 = arith.constant 0 : i32
    %c0_i32_1 = arith.constant 0 : i32
    return %c0_i32, %c0_i32_0 : i32, i32
  }
  func.func @transform_10(%arg0: i32, %arg1: i32) -> (i32, i32) {
    %c0_i32 = arith.constant 0 : i32
    %c0_i32_0 = arith.constant 0 : i32
    %c0_i32_1 = arith.constant 0 : i32
    return %c0_i32, %c0_i32_0 : i32, i32
  }
  func.func @transform_11(%arg0: i32, %arg1: i32) -> (i32, i32) {
    %c0_i32 = arith.constant 0 : i32
    %c0_i32_0 = arith.constant 0 : i32
    %c0_i32_1 = arith.constant 0 : i32
    return %c0_i32, %c0_i32_0 : i32, i32
  }
  func.func @transform_12(%arg0: i32, %arg1: i32) -> (i32, i32) {
    %c0_i32 = arith.constant 0 : i32
    %c0_i32_0 = arith.constant 0 : i32
    %c0_i32_1 = arith.constant 0 : i32
    return %c0_i32, %c0_i32_0 : i32, i32
  }
  func.func @transform_13(%arg0: i32, %arg1: i32) -> (i32, i32) {
    %c0_i32 = arith.constant 0 : i32
    %c0_i32_0 = arith.constant 0 : i32
    %c0_i32_1 = arith.constant 0 : i32
    return %c0_i32, %c0_i32_0 : i32, i32
  }
  func.func @transform_14(%arg0: i32, %arg1: i32) -> (i32, i32) {
    %c0_i32 = arith.constant 0 : i32
    %c0_i32_0 = arith.constant 0 : i32
    %c0_i32_1 = arith.constant 0 : i32
    return %c0_i32, %c0_i32_0 : i32, i32
  }
  func.func @transform_15(%arg0: i32, %arg1: i32) -> (i32, i32) {
    %c0_i32 = arith.constant 0 : i32
    %c0_i32_0 = arith.constant 0 : i32
    %c0_i32_1 = arith.constant 0 : i32
    return %c0_i32, %c0_i32_0 : i32, i32
  }
  func.func @transform_16(%arg0: i32, %arg1: i32) -> (i32, i32) {
    %c0_i32 = arith.constant 0 : i32
    %c0_i32_0 = arith.constant 0 : i32
    %c0_i32_1 = arith.constant 0 : i32
    return %c0_i32, %c0_i32_0 : i32, i32
  }
  func.func @transform_17(%arg0: i32, %arg1: i32) -> (i32, i32) {
    %c0_i32 = arith.constant 0 : i32
    %c0_i32_0 = arith.constant 0 : i32
    %c0_i32_1 = arith.constant 0 : i32
    return %c0_i32, %c0_i32_0 : i32, i32
  }
  func.func @transform_18(%arg0: i32, %arg1: i32) -> (i32, i32) {
    %c0_i32 = arith.constant 0 : i32
    %c0_i32_0 = arith.constant 0 : i32
    %c0_i32_1 = arith.constant 0 : i32
    return %c0_i32, %c0_i32_0 : i32, i32
  }
  func.func @transform_19(%arg0: i32, %arg1: i32) -> (i32, i32) {
    %c0_i32 = arith.constant 0 : i32
    %c0_i32_0 = arith.constant 0 : i32
    %c0_i32_1 = arith.constant 0 : i32
    return %c0_i32, %c0_i32_0 : i32, i32
  }
  func.func @transform_20(%arg0: i32, %arg1: i32) -> (i32, i32) {
    %c0_i32 = arith.constant 0 : i32
    %c0_i32_0 = arith.constant 0 : i32
    %c0_i32_1 = arith.constant 0 : i32
    return %c0_i32, %c0_i32_0 : i32, i32
  }
  func.func @transform_21(%arg0: i32, %arg1: i32) -> (i32, i32, i32) {
    %c0_i32 = arith.constant 0 : i32
    %c0_i32_0 = arith.constant 0 : i32
    return %arg0, %arg1, %c0_i32 : i32, i32, i32
  }
}

</mosaic_0001>

<llo_original>
// kernel: tpu_custom_call.1
$region0: #{tpu_custom_call.1}
  #allocation0 [shape = 'u32[]', space=smem, size = 0x4, offset = 0x4, fixed_abs, tag = 'smem constant byte address 0x4 - core index']
  #allocation1 [shape = 'u32[144,128]{1,0:T(1,128)}', space=vmem, size = 0x12000, scoped, tag = 'internal scratch']
  %s0 = inlined_call_operand.hbm [shape: f32[8,128], index: 0, kind: input, shape index: {}]
  %s1 = inlined_call_operand.hbm [shape: f32[8,128], index: 1, kind: output, shape index: {}]
  %s2 = sld [smem:[#allocation0]]
  $region41: #{tpu_custom_call.1} parent=0
    _
  %s4 = ssub.s32 1, %s2
  %s5 = scalar_select 0, %s4, %s2
  $region1: #{tpu_custom_call.1} parent=0
    #allocation2 [shape = 'u8[4096]{0}', space=vmem, size = 0x1000, scoped, tag = 'input window, operand 0, single buffered']
    #allocation3 [shape = 's32[2]{0}', space=sflag, size = 0x8, scoped, tag = 'scoped memory for tpu_custom_call.1']
    #allocation4 [shape = 's32[2]{0}', space=sflag, size = 0x8, scoped, tag = 'scoped memory for tpu_custom_call.1']
    #allocation5 [shape = 'u8[4096]{0}', space=vmem, size = 0x1000, scoped, tag = 'output window, operand 0, single buffered']
    %6 = vsyncpa [#allocation3], 0
    %7 = vsyncpa [#allocation4], 0
    loop: start=0, step=1, limit=4
    $region2: #{tpu_custom_call.1} parent=1 // loop_pre_header
      _
    $region3: #{tpu_custom_call.1} parent=1 // loop_header
      %s9 = sphi 0, %s13
      %p10 = scmp.ge.s32.totalorder %s9, 4
      %s17 = sphi 0, %s17
      %s19 = sphi 0, %s17
      %s20 = sphi 0, %s19
      %s34 = sphi 0, %s20
      %s38 = sphi 0, %s38
      %s40 = sphi 0, %s38
      %s41 = sphi 0, %s40
      %s55 = sphi 0, %s41
    $region4: #{tpu_custom_call.1} parent=1 // loop_header_branch
      %12 = sbr.rel (%p10) target = $region8
    $region5: #{tpu_custom_call.1} parent=1 // loop_body
      %s14 = ssub.s32 %s9, 1
      %s15 = ssub.s32 %s9, 2
      %s16 = sadd.s32 %s9, 1
      %s18 = sadd.s32 %s17, 1
      %p21 = scmp.eq.s32.totalorder %s9, 1
      %p22 = scmp.ne.s32.totalorder %s17, %s19
      %p23 = scmp.eq.s32.totalorder %s9, 0
      %p24 = por %p22, %p23
      %p25 = scmp.ne.s32.totalorder %s17, %s19
      %p26 = scmp.eq.s32.totalorder %s14, 1
      %p27 = por %p25, %p26
      %p28 = scmp.ne.s32.totalorder %s19, %s20
      %p29 = scmp.eq.s32.totalorder %s14, 0
      %p30 = por %p28, %p29
      %p31 = scmp.ne.s32.totalorder %s19, %s20
      %p32 = scmp.eq.s32.totalorder %s15, 1
      %p33 = por %p31, %p32
      %p35 = scmp.ne.s32.totalorder %s20, %s34
      %p36 = scmp.eq.s32.totalorder %s15, 0
      %p37 = por %p35, %p36
      %s39 = sadd.s32 %s38, 1
      %p42 = scmp.eq.s32.totalorder %s9, 1
      %p43 = scmp.ne.s32.totalorder %s38, %s40
      %p44 = scmp.eq.s32.totalorder %s9, 0
      %p45 = por %p43, %p44
      %p46 = scmp.ne.s32.totalorder %s38, %s40
      %p47 = scmp.eq.s32.totalorder %s14, 1
      %p48 = por %p46, %p47
      %p49 = scmp.ne.s32.totalorder %s40, %s41
      %p50 = scmp.eq.s32.totalorder %s14, 0
      %p51 = por %p49, %p50
      %p52 = scmp.ne.s32.totalorder %s40, %s41
      %p53 = scmp.eq.s32.totalorder %s15, 1
      %p54 = por %p52, %p53
      %p56 = scmp.ne.s32.totalorder %s41, %s55
      %p57 = scmp.eq.s32.totalorder %s15, 0
      %p58 = por %p56, %p57
      %p59 = scmp.le.s32.totalorder 1, %s9
      %p60 = scmp.lt.s32.totalorder %s9, 3
      %p61 = pnand %p59, %p60
      %p62 = pneg %p61
      // Predicated region
      $region9: #{tpu_custom_call.1} parent=5 // pred_check
        _
      $region10: #{tpu_custom_call.1} parent=5 // pred_check_branch
        %64 = sbr.rel (%p61) target = $region12
      $region11: #{tpu_custom_call.1} parent=5 // pred_region
        %s65 = ssub.s32 %s9, 1
        // Predicated region
        $region13: #{tpu_custom_call.1} parent=11 // pred_check
          %p66 = pneg %p30
        $region14: #{tpu_custom_call.1} parent=11 // pred_check_branch
          %68 = sbr.rel (%p66) target = $region16
        $region15: #{tpu_custom_call.1} parent=11 // pred_region
          %s70 = ssub.s32 128, 128
          %71 = vsyncadd [#allocation3], %s70
          %s73 = sshll.u32 [#allocation2], 4
          %s74 = int_to_ptr.vmem [resolvable:$true] %s73
          %76 = dma.hbm_to_vmem [thread:$0]  %s0, 128, %s74, [#allocation3]
        $region16: #{tpu_custom_call.1} parent=11 // pred_fallthru
          _
      $region12: #{tpu_custom_call.1} parent=5 // pred_fallthru
        _
      %p77 = scmp.lt.s32.totalorder %s9, 2
      // Predicated region
      $region17: #{tpu_custom_call.1} parent=5 // pred_check
        %p78 = pneg %p77
      $region18: #{tpu_custom_call.1} parent=5 // pred_check_branch
        %80 = sbr.rel (%p78) target = $region20
      $region19: #{tpu_custom_call.1} parent=5 // pred_region
        _
      $region20: #{tpu_custom_call.1} parent=5 // pred_fallthru
        _
      %p81 = scmp.le.s32.totalorder 1, %s9
      %p82 = scmp.lt.s32.totalorder %s9, 3
      %p83 = pnand %p81, %p82
      %p84 = pneg %p83
      // Predicated region
      $region21: #{tpu_custom_call.1} parent=5 // pred_check
        _
      $region22: #{tpu_custom_call.1} parent=5 // pred_check_branch
        %86 = sbr.rel (%p83) target = $region24
      $region23: #{tpu_custom_call.1} parent=5 // pred_region
        %s87 = ssub.s32 %s9, 1
        // Predicated region
        $region25: #{tpu_custom_call.1} parent=23 // pred_check
          %p88 = pneg %p30
        $region26: #{tpu_custom_call.1} parent=23 // pred_check_branch
          %90 = sbr.rel (%p88) target = $region28
        $region27: #{tpu_custom_call.1} parent=23 // pred_region
          %91 = dma.done [#allocation3], 128
        $region28: #{tpu_custom_call.1} parent=23 // pred_fallthru
          _
        %p92 = pneg %p30
        %p93 = pneg %p27
        %p94 = pneg %p51
        %p95 = pneg %p48
        %v96 = vld [vmem:[#allocation2] sm:$0xff]
        %v97 = vadd.f32 %v96, 1.0
        %98 = vst [vmem:[#allocation5] sm:$0xff] %v97
        // Predicated region
        $region29: #{tpu_custom_call.1} parent=23 // pred_check
          %p99 = pneg %p48
        $region30: #{tpu_custom_call.1} parent=23 // pred_check_branch
          %101 = sbr.rel (%p99) target = $region32
        $region31: #{tpu_custom_call.1} parent=23 // pred_region
          %s103 = ssub.s32 128, 128
          %104 = vsyncadd [#allocation4], %s103
          %s106 = sshll.u32 [#allocation5], 4
          %s107 = int_to_ptr.vmem [resolvable:$true] %s106
          %109 = dma.vmem_to_hbm [thread:$0]  %s107, 128, %s1, [#allocation4]
        $region32: #{tpu_custom_call.1} parent=23 // pred_fallthru
          _
        // Predicated region
        $region33: #{tpu_custom_call.1} parent=23 // pred_check
          %p110 = pneg %p48
        $region34: #{tpu_custom_call.1} parent=23 // pred_check_branch
          %112 = sbr.rel (%p110) target = $region36
        $region35: #{tpu_custom_call.1} parent=23 // pred_region
          %113 = dma.done [#allocation4], 128
        $region36: #{tpu_custom_call.1} parent=23 // pred_fallthru
          _
      $region24: #{tpu_custom_call.1} parent=5 // pred_fallthru
        _
      %p114 = scmp.le.s32.totalorder 2, %s9
      // Predicated region
      $region37: #{tpu_custom_call.1} parent=5 // pred_check
        %p115 = pneg %p114
      $region38: #{tpu_custom_call.1} parent=5 // pred_check_branch
        %117 = sbr.rel (%p115) target = $region40
      $region39: #{tpu_custom_call.1} parent=5 // pred_region
        %s118 = ssub.s32 %s9, 2
      $region40: #{tpu_custom_call.1} parent=5 // pred_fallthru
        _
    $region6: #{tpu_custom_call.1} parent=1 // loop_footer
      %s13 = sadd.s32 1, %s9
    $region7: #{tpu_custom_call.1} parent=1 // loop_footer_branch
      %8 = sbr.rel target = $region3
    $region8: #{tpu_custom_call.1} parent=1 // loop_exit
      _
    %119 = vsyncpa [#allocation3], 1
    %s120 = scalar_lea.sflag [#allocation3], 1
    %121 = vsyncpa %s120, 1
    %122 = vsyncpa [#allocation4], 1
    %s123 = scalar_lea.sflag [#allocation4], 1
    %124 = vsyncpa %s123, 1

// kernel: tpu_custom_call.1
$region0: #{tpu_custom_call.1}
  #allocation0 [shape = 'u32[]', space=smem, size = 0x4, offset = 0x4, fixed_abs, tag = 'smem constant byte address 0x4 - core index']
  #allocation1 [shape = 'u32[144,128]{1,0:T(1,128)}', space=vmem, size = 0x12000, scoped, tag = 'internal scratch']
  #allocation2 [shape = 'f32[8,128]{1,0:T(8,128)}', space=vmem, size = 0x1000, scoped, tag = 'scratch operand']
  #allocation3 [shape = 'f32[8,128]{1,0:T(8,128)}', space=vmem, size = 0x1000, scoped, tag = 'scratch operand']
  #allocation4 [shape = 'f32[8,128]{1,0:T(8,128)}', space=vmem, size = 0x1000, scoped, tag = 'scratch operand']
  #allocation5 [shape = 'f32[8,128]{1,0:T(8,128)}', space=vmem, size = 0x1000, scoped, tag = 'scratch operand']
  %s0 = inlined_call_operand.hbm [shape: f32[2,8,128], index: 0, kind: input, shape index: {}]
  %s1 = inlined_call_operand.hbm [shape: f32[2,8,128], index: 1, kind: input, shape index: {}]
  %s2 = inlined_call_operand.hbm [shape: f32[128,128], index: 2, kind: input, shape index: {}]
  %s3 = inlined_call_operand.vmem [shape: f32[1,128], index: 3, kind: input, shape index: {}]
  %s4 = inlined_call_operand.hbm [shape: f32[128,128], index: 4, kind: input, shape index: {}]
  %s5 = inlined_call_operand.vmem [shape: f32[1,128], index: 5, kind: input, shape index: {}]
  %s6 = inlined_call_operand.hbm [shape: f32[128,256], index: 6, kind: input, shape index: {}]
  %s7 = inlined_call_operand.vmem [shape: f32[1,256], index: 7, kind: input, shape index: {}]
  %s8 = inlined_call_operand.hbm [shape: f32[128,256], index: 8, kind: input, shape index: {}]
  %s9 = inlined_call_operand.vmem [shape: f32[1,256], index: 9, kind: input, shape index: {}]
  %s10 = inlined_call_operand.hbm [shape: f32[128,128], index: 10, kind: input, shape index: {}]
  %s11 = inlined_call_operand.hbm [shape: f32[128,128], index: 11, kind: input, shape index: {}]
  %s12 = inlined_call_operand.vmem [shape: f32[1,128], index: 12, kind: input, shape index: {}]
  %s13 = inlined_call_operand.vmem [shape: f32[1,128], index: 13, kind: input, shape index: {}]
  %s14 = inlined_call_operand.vmem [shape: f32[1,128], index: 14, kind: input, shape index: {}]
  %s15 = inlined_call_operand.vmem [shape: f32[1,128], index: 15, kind: input, shape index: {}]
  %s16 = inlined_call_operand.vmem [shape: f32[1,128], index: 16, kind: input, shape index: {}]
  %s17 = inlined_call_operand.vmem [shape: f32[1,128], index: 17, kind: input, shape index: {}]
  %s18 = inlined_call_operand.vmem [shape: f32[1,128], index: 18, kind: input, shape index: {}]
  %s19 = inlined_call_operand.vmem [shape: f32[1,128], index: 19, kind: input, shape index: {}]
  %s20 = inlined_call_operand.vmem [shape: f32[1,128], index: 20, kind: input, shape index: {}]
  %s21 = inlined_call_operand.hbm [shape: f32[2,8,128], index: 21, kind: output, shape index: {}]
  %s22 = sld [smem:[#allocation0]]
  $region153: #{tpu_custom_call.1} parent=0
    _
  %s24 = ssub.s32 1, %s22
  %s25 = scalar_select 0, %s24, %s22
  $region1: #{tpu_custom_call.1} parent=0
    #allocation6 [shape = 'u8[8192]{0}', space=vmem, size = 0x2000, scoped, tag = 'input window, operand 0']
    #allocation7 [shape = 's32[2]{0}', space=sflag, size = 0x8, scoped, tag = 'scoped memory for tpu_custom_call.1']
    #allocation8 [shape = 's32[2]{0}', space=sflag, size = 0x8, scoped, tag = 'scoped memory for tpu_custom_call.1']
    #allocation9 [shape = 'u8[8192]{0}', space=vmem, size = 0x2000, scoped, tag = 'input window, operand 1']
    #allocation10 [shape = 's32[2]{0}', space=sflag, size = 0x8, scoped, tag = 'scoped memory for tpu_custom_call.1']
    #allocation11 [shape = 'u8[65536]{0}', space=vmem, size = 0x10000, scoped, tag = 'input window, operand 2, single buffered']
    #allocation12 [shape = 'u8[65536]{0}', space=vmem, size = 0x10000, scoped, tag = 'input window, operand 4, single buffered']
    #allocation13 [shape = 's32[1]{0}', space=sflag, size = 0x4, scoped, tag = 'scoped memory for tpu_custom_call.1']
    #allocation14 [shape = 'u8[131072]{0}', space=vmem, size = 0x20000, scoped, tag = 'input window, operand 6, single buffered']
    #allocation15 [shape = 'u8[131072]{0}', space=vmem, size = 0x20000, scoped, tag = 'input window, operand 8, single buffered']
    #allocation16 [shape = 's32[1]{0}', space=sflag, size = 0x4, scoped, tag = 'scoped memory for tpu_custom_call.1']
    #allocation17 [shape = 'u8[65536]{0}', space=vmem, size = 0x10000, scoped, tag = 'input window, operand 10, single buffered']
    #allocation18 [shape = 'u8[65536]{0}', space=vmem, size = 0x10000, scoped, tag = 'input window, operand 11, single buffered']
    #allocation19 [shape = 's32[1]{0}', space=sflag, size = 0x4, scoped, tag = 'scoped memory for tpu_custom_call.1']
    #allocation20 [shape = 'u8[8192]{0}', space=vmem, size = 0x2000, scoped, tag = 'output window, operand 0']
    %26 = vsyncpa [#allocation7], 0
    %s27 = scalar_lea.sflag [#allocation7], 1
    %28 = vsyncpa %s27, 0
    %29 = vsyncpa [#allocation10], 0
    %s30 = scalar_lea.sflag [#allocation10], 1
    %31 = vsyncpa %s30, 0
    %32 = vsyncpa [#allocation13], 0
    %33 = vsyncpa [#allocation16], 0
    %34 = vsyncpa [#allocation19], 0
    %35 = vsyncpa [#allocation8], 0
    %s36 = scalar_lea.sflag [#allocation8], 1
    %37 = vsyncpa %s36, 0
    loop: start=0, step=1, limit=4
    $region2: #{tpu_custom_call.1} parent=1 // loop_pre_header
      _
    $region3: #{tpu_custom_call.1} parent=1 // loop_header
      %s39 = sphi 0, %s43
      %p40 = scmp.ge.s32.totalorder %s39, 4
      %s46 = sphi 0, %s58
      %s47 = sphi 0, %s54
      %s48 = sphi 0, %s46
      %s49 = sphi 0, %s47
      %s50 = sphi 0, %s48
      %s51 = sphi 0, %s49
      %s61 = sphi 0, %s63
      %s64 = sphi 0, %s61
      %s65 = sphi 0, %s64
      %s81 = sphi 0, %s65
      %s87 = sphi 0, %s89
      %s90 = sphi 0, %s87
      %s91 = sphi 0, %s90
      %s107 = sphi 0, %s91
      %s111 = sphi 0, %s111
      %s113 = sphi 0, %s111
      %s114 = sphi 0, %s113
      %s128 = sphi 0, %s114
      %s132 = sphi 0, %s132
      %s134 = sphi 0, %s132
      %s135 = sphi 0, %s134
      %s149 = sphi 0, %s135
      %s153 = sphi 0, %s153
      %s155 = sphi 0, %s153
      %s156 = sphi 0, %s155
      %s170 = sphi 0, %s156
      %s174 = sphi 0, %s174
      %s176 = sphi 0, %s174
      %s177 = sphi 0, %s176
      %s191 = sphi 0, %s177
      %s195 = sphi 0, %s195
      %s197 = sphi 0, %s195
      %s198 = sphi 0, %s197
      %s212 = sphi 0, %s198
      %s216 = sphi 0, %s216
      %s218 = sphi 0, %s216
      %s219 = sphi 0, %s218
      %s233 = sphi 0, %s219
      %s237 = sphi 0, %s237
      %s239 = sphi 0, %s237
      %s240 = sphi 0, %s239
      %s254 = sphi 0, %s240
      %s258 = sphi 0, %s258
      %s260 = sphi 0, %s258
      %s261 = sphi 0, %s260
      %s275 = sphi 0, %s261
      %s279 = sphi 0, %s279
      %s281 = sphi 0, %s279
      %s282 = sphi 0, %s281
      %s296 = sphi 0, %s282
      %s300 = sphi 0, %s300
      %s302 = sphi 0, %s300
      %s303 = sphi 0, %s302
      %s317 = sphi 0, %s303
      %s321 = sphi 0, %s321
      %s323 = sphi 0, %s321
      %s324 = sphi 0, %s323
      %s338 = sphi 0, %s324
      %s342 = sphi 0, %s342
      %s344 = sphi 0, %s342
      %s345 = sphi 0, %s344
      %s359 = sphi 0, %s345
      %s363 = sphi 0, %s363
      %s365 = sphi 0, %s363
      %s366 = sphi 0, %s365
      %s380 = sphi 0, %s366
      %s384 = sphi 0, %s384
      %s386 = sphi 0, %s384
      %s387 = sphi 0, %s386
      %s401 = sphi 0, %s387
      %s405 = sphi 0, %s405
      %s407 = sphi 0, %s405
      %s408 = sphi 0, %s407
      %s422 = sphi 0, %s408
      %s426 = sphi 0, %s426
      %s428 = sphi 0, %s426
      %s429 = sphi 0, %s428
      %s443 = sphi 0, %s429
      %s447 = sphi 0, %s447
      %s449 = sphi 0, %s447
      %s450 = sphi 0, %s449
      %s464 = sphi 0, %s450
      %s468 = sphi 0, %s468
      %s470 = sphi 0, %s468
      %s471 = sphi 0, %s470
      %s485 = sphi 0, %s471
      %s489 = sphi 0, %s489
      %s491 = sphi 0, %s489
      %s492 = sphi 0, %s491
      %s506 = sphi 0, %s492
      %s514 = sphi 0, %s516
      %s517 = sphi 0, %s514
      %s518 = sphi 0, %s517
      %s534 = sphi 0, %s518
    $region4: #{tpu_custom_call.1} parent=1 // loop_header_branch
      %42 = sbr.rel (%p40) target = $region8
    $region5: #{tpu_custom_call.1} parent=1 // loop_body
      %s44 = ssub.s32 %s39, 1
      %s45 = ssub.s32 %s39, 2
      %s52 = sadd.s32 1, %s47
      %p53 = scmp.ge.s32.totalorder %s52, 1
      %s54 = scalar_select %p53, 0, %s52
      %s55 = sadd.s32 1, %s46
      %s56 = scalar_select %p53, %s55, %s46
      %p57 = scmp.ge.s32.totalorder %s56, 2
      %s58 = scalar_select %p57, 0, %s56
      %s59 = ssub.s32 %s46, %s58
      %p60 = scmp.eq.s32.totalorder %s59, 0
      %s62 = sadd.s32 %s61, 1
      %s63 = scalar_select %p60, %s61, %s62
      %p66 = pneg %p60
      %p67 = scmp.eq.s32.totalorder %s39, 1
      %p68 = por %p66, %p67
      %p69 = scmp.ne.s32.totalorder %s61, %s64
      %p70 = scmp.eq.s32.totalorder %s39, 0
      %p71 = por %p69, %p70
      %p72 = scmp.ne.s32.totalorder %s61, %s64
      %p73 = scmp.eq.s32.totalorder %s44, 1
      %p74 = por %p72, %p73
      %p75 = scmp.ne.s32.totalorder %s64, %s65
      %p76 = scmp.eq.s32.totalorder %s44, 0
      %p77 = por %p75, %p76
      %p78 = scmp.ne.s32.totalorder %s64, %s65
      %p79 = scmp.eq.s32.totalorder %s45, 1
      %p80 = por %p78, %p79
      %p82 = scmp.ne.s32.totalorder %s65, %s81
      %p83 = scmp.eq.s32.totalorder %s45, 0
      %p84 = por %p82, %p83
      %s85 = ssub.s32 %s46, %s58
      %p86 = scmp.eq.s32.totalorder %s85, 0
      %s88 = sadd.s32 %s87, 1
      %s89 = scalar_select %p86, %s87, %s88
      %p92 = pneg %p86
      %p93 = scmp.eq.s32.totalorder %s39, 1
      %p94 = por %p92, %p93
      %p95 = scmp.ne.s32.totalorder %s87, %s90
      %p96 = scmp.eq.s32.totalorder %s39, 0
      %p97 = por %p95, %p96
      %p98 = scmp.ne.s32.totalorder %s87, %s90
      %p99 = scmp.eq.s32.totalorder %s44, 1
      %p100 = por %p98, %p99
      %p101 = scmp.ne.s32.totalorder %s90, %s91
      %p102 = scmp.eq.s32.totalorder %s44, 0
      %p103 = por %p101, %p102
      %p104 = scmp.ne.s32.totalorder %s90, %s91
      %p105 = scmp.eq.s32.totalorder %s45, 1
      %p106 = por %p104, %p105
      %p108 = scmp.ne.s32.totalorder %s91, %s107
      %p109 = scmp.eq.s32.totalorder %s45, 0
      %p110 = por %p108, %p109
      %s112 = sadd.s32 %s111, 1
      %p115 = scmp.eq.s32.totalorder %s39, 1
      %p116 = scmp.ne.s32.totalorder %s111, %s113
      %p117 = scmp.eq.s32.totalorder %s39, 0
      %p118 = por %p116, %p117
      %p119 = scmp.ne.s32.totalorder %s111, %s113
      %p120 = scmp.eq.s32.totalorder %s44, 1
      %p121 = por %p119, %p120
      %p122 = scmp.ne.s32.totalorder %s113, %s114
      %p123 = scmp.eq.s32.totalorder %s44, 0
      %p124 = por %p122, %p123
      %p125 = scmp.ne.s32.totalorder %s113, %s114
      %p126 = scmp.eq.s32.totalorder %s45, 1
      %p127 = por %p125, %p126
      %p129 = scmp.ne.s32.totalorder %s114, %s128
      %p130 = scmp.eq.s32.totalorder %s45, 0
      %p131 = por %p129, %p130
      %s133 = sadd.s32 %s132, 1
      %p136 = scmp.eq.s32.totalorder %s39, 1
      %p137 = scmp.ne.s32.totalorder %s132, %s134
      %p138 = scmp.eq.s32.totalorder %s39, 0
      %p139 = por %p137, %p138
      %p140 = scmp.ne.s32.totalorder %s132, %s134
      %p141 = scmp.eq.s32.totalorder %s44, 1
      %p142 = por %p140, %p141
      %p143 = scmp.ne.s32.totalorder %s134, %s135
      %p144 = scmp.eq.s32.totalorder %s44, 0
      %p145 = por %p143, %p144
      %p146 = scmp.ne.s32.totalorder %s134, %s135
      %p147 = scmp.eq.s32.totalorder %s45, 1
      %p148 = por %p146, %p147
      %p150 = scmp.ne.s32.totalorder %s135, %s149
      %p151 = scmp.eq.s32.totalorder %s45, 0
      %p152 = por %p150, %p151
      %s154 = sadd.s32 %s153, 1
      %p157 = scmp.eq.s32.totalorder %s39, 1
      %p158 = scmp.ne.s32.totalorder %s153, %s155
      %p159 = scmp.eq.s32.totalorder %s39, 0
      %p160 = por %p158, %p159
      %p161 = scmp.ne.s32.totalorder %s153, %s155
      %p162 = scmp.eq.s32.totalorder %s44, 1
      %p163 = por %p161, %p162
      %p164 = scmp.ne.s32.totalorder %s155, %s156
      %p165 = scmp.eq.s32.totalorder %s44, 0
      %p166 = por %p164, %p165
      %p167 = scmp.ne.s32.totalorder %s155, %s156
      %p168 = scmp.eq.s32.totalorder %s45, 1
      %p169 = por %p167, %p168
      %p171 = scmp.ne.s32.totalorder %s156, %s170
      %p172 = scmp.eq.s32.totalorder %s45, 0
      %p173 = por %p171, %p172
      %s175 = sadd.s32 %s174, 1
      %p178 = scmp.eq.s32.totalorder %s39, 1
      %p179 = scmp.ne.s32.totalorder %s174, %s176
      %p180 = scmp.eq.s32.totalorder %s39, 0
      %p181 = por %p179, %p180
      %p182 = scmp.ne.s32.totalorder %s174, %s176
      %p183 = scmp.eq.s32.totalorder %s44, 1
      %p184 = por %p182, %p183
      %p185 = scmp.ne.s32.totalorder %s176, %s177
      %p186 = scmp.eq.s32.totalorder %s44, 0
      %p187 = por %p185, %p186
      %p188 = scmp.ne.s32.totalorder %s176, %s177
      %p189 = scmp.eq.s32.totalorder %s45, 1
      %p190 = por %p188, %p189
      %p192 = scmp.ne.s32.totalorder %s177, %s191
      %p193 = scmp.eq.s32.totalorder %s45, 0
      %p194 = por %p192, %p193
      %s196 = sadd.s32 %s195, 1
      %p199 = scmp.eq.s32.totalorder %s39, 1
      %p200 = scmp.ne.s32.totalorder %s195, %s197
      %p201 = scmp.eq.s32.totalorder %s39, 0
      %p202 = por %p200, %p201
      %p203 = scmp.ne.s32.totalorder %s195, %s197
      %p204 = scmp.eq.s32.totalorder %s44, 1
      %p205 = por %p203, %p204
      %p206 = scmp.ne.s32.totalorder %s197, %s198
      %p207 = scmp.eq.s32.totalorder %s44, 0
      %p208 = por %p206, %p207
      %p209 = scmp.ne.s32.totalorder %s197, %s198
      %p210 = scmp.eq.s32.totalorder %s45, 1
      %p211 = por %p209, %p210
      %p213 = scmp.ne.s32.totalorder %s198, %s212
      %p214 = scmp.eq.s32.totalorder %s45, 0
      %p215 = por %p213, %p214
      %s217 = sadd.s32 %s216, 1
      %p220 = scmp.eq.s32.totalorder %s39, 1
      %p221 = scmp.ne.s32.totalorder %s216, %s218
      %p222 = scmp.eq.s32.totalorder %s39, 0
      %p223 = por %p221, %p222
      %p224 = scmp.ne.s32.totalorder %s216, %s218
      %p225 = scmp.eq.s32.totalorder %s44, 1
      %p226 = por %p224, %p225
      %p227 = scmp.ne.s32.totalorder %s218, %s219
      %p228 = scmp.eq.s32.totalorder %s44, 0
      %p229 = por %p227, %p228
      %p230 = scmp.ne.s32.totalorder %s218, %s219
      %p231 = scmp.eq.s32.totalorder %s45, 1
      %p232 = por %p230, %p231
      %p234 = scmp.ne.s32.totalorder %s219, %s233
      %p235 = scmp.eq.s32.totalorder %s45, 0
      %p236 = por %p234, %p235
      %s238 = sadd.s32 %s237, 1
      %p241 = scmp.eq.s32.totalorder %s39, 1
      %p242 = scmp.ne.s32.totalorder %s237, %s239
      %p243 = scmp.eq.s32.totalorder %s39, 0
      %p244 = por %p242, %p243
      %p245 = scmp.ne.s32.totalorder %s237, %s239
      %p246 = scmp.eq.s32.totalorder %s44, 1
      %p247 = por %p245, %p246
      %p248 = scmp.ne.s32.totalorder %s239, %s240
      %p249 = scmp.eq.s32.totalorder %s44, 0
      %p250 = por %p248, %p249
      %p251 = scmp.ne.s32.totalorder %s239, %s240
      %p252 = scmp.eq.s32.totalorder %s45, 1
      %p253 = por %p251, %p252
      %p255 = scmp.ne.s32.totalorder %s240, %s254
      %p256 = scmp.eq.s32.totalorder %s45, 0
      %p257 = por %p255, %p256
      %s259 = sadd.s32 %s258, 1
      %p262 = scmp.eq.s32.totalorder %s39, 1
      %p263 = scmp.ne.s32.totalorder %s258, %s260
      %p264 = scmp.eq.s32.totalorder %s39, 0
      %p265 = por %p263, %p264
      %p266 = scmp.ne.s32.totalorder %s258, %s260
      %p267 = scmp.eq.s32.totalorder %s44, 1
      %p268 = por %p266, %p267
      %p269 = scmp.ne.s32.totalorder %s260, %s261
      %p270 = scmp.eq.s32.totalorder %s44, 0
      %p271 = por %p269, %p270
      %p272 = scmp.ne.s32.totalorder %s260, %s261
      %p273 = scmp.eq.s32.totalorder %s45, 1
      %p274 = por %p272, %p273
      %p276 = scmp.ne.s32.totalorder %s261, %s275
      %p277 = scmp.eq.s32.totalorder %s45, 0
      %p278 = por %p276, %p277
      %s280 = sadd.s32 %s279, 1
      %p283 = scmp.eq.s32.totalorder %s39, 1
      %p284 = scmp.ne.s32.totalorder %s279, %s281
      %p285 = scmp.eq.s32.totalorder %s39, 0
      %p286 = por %p284, %p285
      %p287 = scmp.ne.s32.totalorder %s279, %s281
      %p288 = scmp.eq.s32.totalorder %s44, 1
      %p289 = por %p287, %p288
      %p290 = scmp.ne.s32.totalorder %s281, %s282
      %p291 = scmp.eq.s32.totalorder %s44, 0
      %p292 = por %p290, %p291
      %p293 = scmp.ne.s32.totalorder %s281, %s282
      %p294 = scmp.eq.s32.totalorder %s45, 1
      %p295 = por %p293, %p294
      %p297 = scmp.ne.s32.totalorder %s282, %s296
      %p298 = scmp.eq.s32.totalorder %s45, 0
      %p299 = por %p297, %p298
      %s301 = sadd.s32 %s300, 1
      %p304 = scmp.eq.s32.totalorder %s39, 1
      %p305 = scmp.ne.s32.totalorder %s300, %s302
      %p306 = scmp.eq.s32.totalorder %s39, 0
      %p307 = por %p305, %p306
      %p308 = scmp.ne.s32.totalorder %s300, %s302
      %p309 = scmp.eq.s32.totalorder %s44, 1
      %p310 = por %p308, %p309
      %p311 = scmp.ne.s32.totalorder %s302, %s303
      %p312 = scmp.eq.s32.totalorder %s44, 0
      %p313 = por %p311, %p312
      %p314 = scmp.ne.s32.totalorder %s302, %s303
      %p315 = scmp.eq.s32.totalorder %s45, 1
      %p316 = por %p314, %p315
      %p318 = scmp.ne.s32.totalorder %s303, %s317
      %p319 = scmp.eq.s32.totalorder %s45, 0
      %p320 = por %p318, %p319
      %s322 = sadd.s32 %s321, 1
      %p325 = scmp.eq.s32.totalorder %s39, 1
      %p326 = scmp.ne.s32.totalorder %s321, %s323
      %p327 = scmp.eq.s32.totalorder %s39, 0
      %p328 = por %p326, %p327
      %p329 = scmp.ne.s32.totalorder %s321, %s323
      %p330 = scmp.eq.s32.totalorder %s44, 1
      %p331 = por %p329, %p330
      %p332 = scmp.ne.s32.totalorder %s323, %s324
      %p333 = scmp.eq.s32.totalorder %s44, 0
      %p334 = por %p332, %p333
      %p335 = scmp.ne.s32.totalorder %s323, %s324
      %p336 = scmp.eq.s32.totalorder %s45, 1
      %p337 = por %p335, %p336
      %p339 = scmp.ne.s32.totalorder %s324, %s338
      %p340 = scmp.eq.s32.totalorder %s45, 0
      %p341 = por %p339, %p340
      %s343 = sadd.s32 %s342, 1
      %p346 = scmp.eq.s32.totalorder %s39, 1
      %p347 = scmp.ne.s32.totalorder %s342, %s344
      %p348 = scmp.eq.s32.totalorder %s39, 0
      %p349 = por %p347, %p348
      %p350 = scmp.ne.s32.totalorder %s342, %s344
      %p351 = scmp.eq.s32.totalorder %s44, 1
      %p352 = por %p350, %p351
      %p353 = scmp.ne.s32.totalorder %s344, %s345
      %p354 = scmp.eq.s32.totalorder %s44, 0
      %p355 = por %p353, %p354
      %p356 = scmp.ne.s32.totalorder %s344, %s345
      %p357 = scmp.eq.s32.totalorder %s45, 1
      %p358 = por %p356, %p357
      %p360 = scmp.ne.s32.totalorder %s345, %s359
      %p361 = scmp.eq.s32.totalorder %s45, 0
      %p362 = por %p360, %p361
      %s364 = sadd.s32 %s363, 1
      %p367 = scmp.eq.s32.totalorder %s39, 1
      %p368 = scmp.ne.s32.totalorder %s363, %s365
      %p369 = scmp.eq.s32.totalorder %s39, 0
      %p370 = por %p368, %p369
      %p371 = scmp.ne.s32.totalorder %s363, %s365
      %p372 = scmp.eq.s32.totalorder %s44, 1
      %p373 = por %p371, %p372
      %p374 = scmp.ne.s32.totalorder %s365, %s366
      %p375 = scmp.eq.s32.totalorder %s44, 0
      %p376 = por %p374, %p375
      %p377 = scmp.ne.s32.totalorder %s365, %s366
      %p378 = scmp.eq.s32.totalorder %s45, 1
      %p379 = por %p377, %p378
      %p381 = scmp.ne.s32.totalorder %s366, %s380
      %p382 = scmp.eq.s32.totalorder %s45, 0
      %p383 = por %p381, %p382
      %s385 = sadd.s32 %s384, 1
      %p388 = scmp.eq.s32.totalorder %s39, 1
      %p389 = scmp.ne.s32.totalorder %s384, %s386
      %p390 = scmp.eq.s32.totalorder %s39, 0
      %p391 = por %p389, %p390
      %p392 = scmp.ne.s32.totalorder %s384, %s386
      %p393 = scmp.eq.s32.totalorder %s44, 1
      %p394 = por %p392, %p393
      %p395 = scmp.ne.s32.totalorder %s386, %s387
      %p396 = scmp.eq.s32.totalorder %s44, 0
      %p397 = por %p395, %p396
      %p398 = scmp.ne.s32.totalorder %s386, %s387
      %p399 = scmp.eq.s32.totalorder %s45, 1
      %p400 = por %p398, %p399
      %p402 = scmp.ne.s32.totalorder %s387, %s401
      %p403 = scmp.eq.s32.totalorder %s45, 0
      %p404 = por %p402, %p403
      %s406 = sadd.s32 %s405, 1
      %p409 = scmp.eq.s32.totalorder %s39, 1
      %p410 = scmp.ne.s32.totalorder %s405, %s407
      %p411 = scmp.eq.s32.totalorder %s39, 0
      %p412 = por %p410, %p411
      %p413 = scmp.ne.s32.totalorder %s405, %s407
      %p414 = scmp.eq.s32.totalorder %s44, 1
      %p415 = por %p413, %p414
      %p416 = scmp.ne.s32.totalorder %s407, %s408
      %p417 = scmp.eq.s32.totalorder %s44, 0
      %p418 = por %p416, %p417
      %p419 = scmp.ne.s32.totalorder %s407, %s408
      %p420 = scmp.eq.s32.totalorder %s45, 1
      %p421 = por %p419, %p420
      %p423 = scmp.ne.s32.totalorder %s408, %s422
      %p424 = scmp.eq.s32.totalorder %s45, 0
      %p425 = por %p423, %p424
      %s427 = sadd.s32 %s426, 1
      %p430 = scmp.eq.s32.totalorder %s39, 1
      %p431 = scmp.ne.s32.totalorder %s426, %s428
      %p432 = scmp.eq.s32.totalorder %s39, 0
      %p433 = por %p431, %p432
      %p434 = scmp.ne.s32.totalorder %s426, %s428
      %p435 = scmp.eq.s32.totalorder %s44, 1
      %p436 = por %p434, %p435
      %p437 = scmp.ne.s32.totalorder %s428, %s429
      %p438 = scmp.eq.s32.totalorder %s44, 0
      %p439 = por %p437, %p438
      %p440 = scmp.ne.s32.totalorder %s428, %s429
      %p441 = scmp.eq.s32.totalorder %s45, 1
      %p442 = por %p440, %p441
      %p444 = scmp.ne.s32.totalorder %s429, %s443
      %p445 = scmp.eq.s32.totalorder %s45, 0
      %p446 = por %p444, %p445
      %s448 = sadd.s32 %s447, 1
      %p451 = scmp.eq.s32.totalorder %s39, 1
      %p452 = scmp.ne.s32.totalorder %s447, %s449
      %p453 = scmp.eq.s32.totalorder %s39, 0
      %p454 = por %p452, %p453
      %p455 = scmp.ne.s32.totalorder %s447, %s449
      %p456 = scmp.eq.s32.totalorder %s44, 1
      %p457 = por %p455, %p456
      %p458 = scmp.ne.s32.totalorder %s449, %s450
      %p459 = scmp.eq.s32.totalorder %s44, 0
      %p460 = por %p458, %p459
      %p461 = scmp.ne.s32.totalorder %s449, %s450
      %p462 = scmp.eq.s32.totalorder %s45, 1
      %p463 = por %p461, %p462
      %p465 = scmp.ne.s32.totalorder %s450, %s464
      %p466 = scmp.eq.s32.totalorder %s45, 0
      %p467 = por %p465, %p466
      %s469 = sadd.s32 %s468, 1
      %p472 = scmp.eq.s32.totalorder %s39, 1
      %p473 = scmp.ne.s32.totalorder %s468, %s470
      %p474 = scmp.eq.s32.totalorder %s39, 0
      %p475 = por %p473, %p474
      %p476 = scmp.ne.s32.totalorder %s468, %s470
      %p477 = scmp.eq.s32.totalorder %s44, 1
      %p478 = por %p476, %p477
      %p479 = scmp.ne.s32.totalorder %s470, %s471
      %p480 = scmp.eq.s32.totalorder %s44, 0
      %p481 = por %p479, %p480
      %p482 = scmp.ne.s32.totalorder %s470, %s471
      %p483 = scmp.eq.s32.totalorder %s45, 1
      %p484 = por %p482, %p483
      %p486 = scmp.ne.s32.totalorder %s471, %s485
      %p487 = scmp.eq.s32.totalorder %s45, 0
      %p488 = por %p486, %p487
      %s490 = sadd.s32 %s489, 1
      %p493 = scmp.eq.s32.totalorder %s39, 1
      %p494 = scmp.ne.s32.totalorder %s489, %s491
      %p495 = scmp.eq.s32.totalorder %s39, 0
      %p496 = por %p494, %p495
      %p497 = scmp.ne.s32.totalorder %s489, %s491
      %p498 = scmp.eq.s32.totalorder %s44, 1
      %p499 = por %p497, %p498
      %p500 = scmp.ne.s32.totalorder %s491, %s492
      %p501 = scmp.eq.s32.totalorder %s44, 0
      %p502 = por %p500, %p501
      %p503 = scmp.ne.s32.totalorder %s491, %s492
      %p504 = scmp.eq.s32.totalorder %s45, 1
      %p505 = por %p503, %p504
      %p507 = scmp.ne.s32.totalorder %s492, %s506
      %p508 = scmp.eq.s32.totalorder %s45, 0
      %p509 = por %p507, %p508
      %s510 = ssub.s32 %s46, %s58
      %s511 = ssub.s32 %s47, %s54
      %s512 = sor.u32 %s510, %s511
      %p513 = scmp.eq.s32.totalorder %s512, 0
      %s515 = sadd.s32 %s514, 1
      %s516 = scalar_select %p513, %s514, %s515
      %p519 = pneg %p513
      %p520 = scmp.eq.s32.totalorder %s39, 1
      %p521 = por %p519, %p520
      %p522 = scmp.ne.s32.totalorder %s514, %s517
      %p523 = scmp.eq.s32.totalorder %s39, 0
      %p524 = por %p522, %p523
      %p525 = scmp.ne.s32.totalorder %s514, %s517
      %p526 = scmp.eq.s32.totalorder %s44, 1
      %p527 = por %p525, %p526
      %p528 = scmp.ne.s32.totalorder %s517, %s518
      %p529 = scmp.eq.s32.totalorder %s44, 0
      %p530 = por %p528, %p529
      %p531 = scmp.ne.s32.totalorder %s517, %s518
      %p532 = scmp.eq.s32.totalorder %s45, 1
      %p533 = por %p531, %p532
      %p535 = scmp.ne.s32.totalorder %s518, %s534
      %p536 = scmp.eq.s32.totalorder %s45, 0
      %p537 = por %p535, %p536
      %p538 = scmp.le.s32.totalorder 1, %s39
      %p539 = scmp.lt.s32.totalorder %s39, 3
      %p540 = pnand %p538, %p539
      %p541 = pneg %p540
      // Predicated region
      $region9: #{tpu_custom_call.1} parent=5 // pred_check
        _
      $region10: #{tpu_custom_call.1} parent=5 // pred_check_branch
        %543 = sbr.rel (%p540) target = $region12
      $region11: #{tpu_custom_call.1} parent=5 // pred_region
        %s544 = ssub.s32 %s39, 1
        // Predicated region
        $region13: #{tpu_custom_call.1} parent=11 // pred_check
          %p545 = pneg %p124
        $region14: #{tpu_custom_call.1} parent=11 // pred_check_branch
          %547 = sbr.rel (%p545) target = $region16
        $region15: #{tpu_custom_call.1} parent=11 // pred_region
          %s549 = ssub.s32 2048, 2048
          %550 = vsyncadd [#allocation10], %s549
          %s551 = sshll.u32 [#allocation11], 4
          %s552 = int_to_ptr.vmem [resolvable:$true] %s551
          %557 = dma.hbm_to_vmem [thread:$0]  %s2, 2048, %s552, [#allocation10], 128, 128, 8
        $region16: #{tpu_custom_call.1} parent=11 // pred_fallthru
          _
        // Predicated region
        $region17: #{tpu_custom_call.1} parent=11 // pred_check
          %p558 = pneg %p145
        $region18: #{tpu_custom_call.1} parent=11 // pred_check_branch
          %560 = sbr.rel (%p558) target = $region20
        $region19: #{tpu_custom_call.1} parent=11 // pred_region
          _
        $region20: #{tpu_custom_call.1} parent=11 // pred_fallthru
          _
        // Predicated region
        $region21: #{tpu_custom_call.1} parent=11 // pred_check
          %p561 = pneg %p166
        $region22: #{tpu_custom_call.1} parent=11 // pred_check_branch
          %563 = sbr.rel (%p561) target = $region24
        $region23: #{tpu_custom_call.1} parent=11 // pred_region
          %s565 = ssub.s32 2048, 2048
          %566 = vsyncadd [#allocation13], %s565
          %s567 = sshll.u32 [#allocation12], 4
          %s568 = int_to_ptr.vmem [resolvable:$true] %s567
          %573 = dma.hbm_to_vmem [thread:$0]  %s4, 2048, %s568, [#allocation13], 128, 128, 8
        $region24: #{tpu_custom_call.1} parent=11 // pred_fallthru
          _
        // Predicated region
        $region25: #{tpu_custom_call.1} parent=11 // pred_check
          %p574 = pneg %p187
        $region26: #{tpu_custom_call.1} parent=11 // pred_check_branch
          %576 = sbr.rel (%p574) target = $region28
        $region27: #{tpu_custom_call.1} parent=11 // pred_region
          _
        $region28: #{tpu_custom_call.1} parent=11 // pred_fallthru
          _
        // Predicated region
        $region29: #{tpu_custom_call.1} parent=11 // pred_check
          %p577 = pneg %p208
        $region30: #{tpu_custom_call.1} parent=11 // pred_check_branch
          %579 = sbr.rel (%p577) target = $region32
        $region31: #{tpu_custom_call.1} parent=11 // pred_region
          %s581 = ssub.s32 4096, 4096
          %582 = vsyncadd [#allocation13], %s581
          %s583 = sshll.u32 [#allocation14], 4
          %s584 = int_to_ptr.vmem [resolvable:$true] %s583
          %589 = dma.hbm_to_vmem [thread:$0]  %s6, 4096, %s584, [#allocation13], 256, 256, 16
        $region32: #{tpu_custom_call.1} parent=11 // pred_fallthru
          _
        // Predicated region
        $region33: #{tpu_custom_call.1} parent=11 // pred_check
          %p590 = pneg %p229
        $region34: #{tpu_custom_call.1} parent=11 // pred_check_branch
          %592 = sbr.rel (%p590) target = $region36
        $region35: #{tpu_custom_call.1} parent=11 // pred_region
          _
        $region36: #{tpu_custom_call.1} parent=11 // pred_fallthru
          _
        // Predicated region
        $region37: #{tpu_custom_call.1} parent=11 // pred_check
          %p593 = pneg %p250
        $region38: #{tpu_custom_call.1} parent=11 // pred_check_branch
          %595 = sbr.rel (%p593) target = $region40
        $region39: #{tpu_custom_call.1} parent=11 // pred_region
          %s597 = ssub.s32 4096, 4096
          %598 = vsyncadd [#allocation16], %s597
          %s599 = sshll.u32 [#allocation15], 4
          %s600 = int_to_ptr.vmem [resolvable:$true] %s599
          %605 = dma.hbm_to_vmem [thread:$0]  %s8, 4096, %s600, [#allocation16], 256, 256, 16
        $region40: #{tpu_custom_call.1} parent=11 // pred_fallthru
          _
        // Predicated region
        $region41: #{tpu_custom_call.1} parent=11 // pred_check
          %p606 = pneg %p271
        $region42: #{tpu_custom_call.1} parent=11 // pred_check_branch
          %608 = sbr.rel (%p606) target = $region44
        $region43: #{tpu_custom_call.1} parent=11 // pred_region
          _
        $region44: #{tpu_custom_call.1} parent=11 // pred_fallthru
          _
        // Predicated region
        $region45: #{tpu_custom_call.1} parent=11 // pred_check
          %p609 = pneg %p292
        $region46: #{tpu_custom_call.1} parent=11 // pred_check_branch
          %611 = sbr.rel (%p609) target = $region48
        $region47: #{tpu_custom_call.1} parent=11 // pred_region
          %s613 = ssub.s32 2048, 2048
          %614 = vsyncadd [#allocation16], %s613
          %s615 = sshll.u32 [#allocation17], 4
          %s616 = int_to_ptr.vmem [resolvable:$true] %s615
          %621 = dma.hbm_to_vmem [thread:$0]  %s10, 2048, %s616, [#allocation16], 128, 128, 8
        $region48: #{tpu_custom_call.1} parent=11 // pred_fallthru
          _
        // Predicated region
        $region49: #{tpu_custom_call.1} parent=11 // pred_check
          %p622 = pneg %p313
        $region50: #{tpu_custom_call.1} parent=11 // pred_check_branch
          %624 = sbr.rel (%p622) target = $region52
        $region51: #{tpu_custom_call.1} parent=11 // pred_region
          %s626 = ssub.s32 2048, 2048
          %627 = vsyncadd [#allocation19], %s626
          %s628 = sshll.u32 [#allocation18], 4
          %s629 = int_to_ptr.vmem [resolvable:$true] %s628
          %634 = dma.hbm_to_vmem [thread:$0]  %s11, 2048, %s629, [#allocation19], 128, 128, 8
        $region52: #{tpu_custom_call.1} parent=11 // pred_fallthru
          _
        // Predicated region
        $region53: #{tpu_custom_call.1} parent=11 // pred_check
          %p635 = pneg %p334
        $region54: #{tpu_custom_call.1} parent=11 // pred_check_branch
          %637 = sbr.rel (%p635) target = $region56
        $region55: #{tpu_custom_call.1} parent=11 // pred_region
          _
        $region56: #{tpu_custom_call.1} parent=11 // pred_fallthru
          _
        // Predicated region
        $region57: #{tpu_custom_call.1} parent=11 // pred_check
          %p638 = pneg %p355
        $region58: #{tpu_custom_call.1} parent=11 // pred_check_branch
          %640 = sbr.rel (%p638) target = $region60
        $region59: #{tpu_custom_call.1} parent=11 // pred_region
          _
        $region60: #{tpu_custom_call.1} parent=11 // pred_fallthru
          _
        // Predicated region
        $region61: #{tpu_custom_call.1} parent=11 // pred_check
          %p641 = pneg %p376
        $region62: #{tpu_custom_call.1} parent=11 // pred_check_branch
          %643 = sbr.rel (%p641) target = $region64
        $region63: #{tpu_custom_call.1} parent=11 // pred_region
          _
        $region64: #{tpu_custom_call.1} parent=11 // pred_fallthru
          _
        // Predicated region
        $region65: #{tpu_custom_call.1} parent=11 // pred_check
          %p644 = pneg %p397
        $region66: #{tpu_custom_call.1} parent=11 // pred_check_branch
          %646 = sbr.rel (%p644) target = $region68
        $region67: #{tpu_custom_call.1} parent=11 // pred_region
          _
        $region68: #{tpu_custom_call.1} parent=11 // pred_fallthru
          _
        // Predicated region
        $region69: #{tpu_custom_call.1} parent=11 // pred_check
          %p647 = pneg %p418
        $region70: #{tpu_custom_call.1} parent=11 // pred_check_branch
          %649 = sbr.rel (%p647) target = $region72
        $region71: #{tpu_custom_call.1} parent=11 // pred_region
          _
        $region72: #{tpu_custom_call.1} parent=11 // pred_fallthru
          _
        // Predicated region
        $region73: #{tpu_custom_call.1} parent=11 // pred_check
          %p650 = pneg %p439
        $region74: #{tpu_custom_call.1} parent=11 // pred_check_branch
          %652 = sbr.rel (%p650) target = $region76
        $region75: #{tpu_custom_call.1} parent=11 // pred_region
          _
        $region76: #{tpu_custom_call.1} parent=11 // pred_fallthru
          _
        // Predicated region
        $region77: #{tpu_custom_call.1} parent=11 // pred_check
          %p653 = pneg %p460
        $region78: #{tpu_custom_call.1} parent=11 // pred_check_branch
          %655 = sbr.rel (%p653) target = $region80
        $region79: #{tpu_custom_call.1} parent=11 // pred_region
          _
        $region80: #{tpu_custom_call.1} parent=11 // pred_fallthru
          _
        // Predicated region
        $region81: #{tpu_custom_call.1} parent=11 // pred_check
          %p656 = pneg %p481
        $region82: #{tpu_custom_call.1} parent=11 // pred_check_branch
          %658 = sbr.rel (%p656) target = $region84
        $region83: #{tpu_custom_call.1} parent=11 // pred_region
          _
        $region84: #{tpu_custom_call.1} parent=11 // pred_fallthru
          _
        // Predicated region
        $region85: #{tpu_custom_call.1} parent=11 // pred_check
          %p659 = pneg %p502
        $region86: #{tpu_custom_call.1} parent=11 // pred_check_branch
          %661 = sbr.rel (%p659) target = $region88
        $region87: #{tpu_custom_call.1} parent=11 // pred_region
          _
        $region88: #{tpu_custom_call.1} parent=11 // pred_fallthru
          _
      $region12: #{tpu_custom_call.1} parent=5 // pred_fallthru
        _
      %p662 = scmp.lt.s32.totalorder %s39, 2
      // Predicated region
      $region89: #{tpu_custom_call.1} parent=5 // pred_check
        %p663 = pneg %p662
      $region90: #{tpu_custom_call.1} parent=5 // pred_check_branch
        %665 = sbr.rel (%p663) target = $region92
      $region91: #{tpu_custom_call.1} parent=5 // pred_region
        // Predicated region
        $region93: #{tpu_custom_call.1} parent=91 // pred_check
          %p666 = pneg %p71
        $region94: #{tpu_custom_call.1} parent=91 // pred_check_branch
          %668 = sbr.rel (%p666) target = $region96
        $region95: #{tpu_custom_call.1} parent=91 // pred_region
          %s669 = sand.u32 %s61, 1
          %s670 = scalar_lea.sflag [#allocation7], %s669
          %s671 = sand.u32 %s61, 1
          %s672 = smul.addr %s671, 8
          %s673 = scalar_lea.vmem [#allocation6], %s672
          %s675 = ssub.s32 128, 128
          %676 = vsyncadd %s670, %s675
          %s677 = smul.addr %s46, 128
          %s678 = scalar_lea.hbm %s0, %s677
          %s680 = sshll.u32 %s673, 4
          %s681 = int_to_ptr.vmem [resolvable:$true] %s680
          %683 = dma.hbm_to_vmem [thread:$0]  %s678, 128, %s681, %s670
        $region96: #{tpu_custom_call.1} parent=91 // pred_fallthru
          _
        // Predicated region
        $region97: #{tpu_custom_call.1} parent=91 // pred_check
          %p684 = pneg %p97
        $region98: #{tpu_custom_call.1} parent=91 // pred_check_branch
          %686 = sbr.rel (%p684) target = $region100
        $region99: #{tpu_custom_call.1} parent=91 // pred_region
          %s687 = sand.u32 %s39, 1
          %s688 = scalar_lea.sflag [#allocation10], %s687
          %s689 = sand.u32 %s87, 1
          %s690 = smul.addr %s689, 8
          %s691 = scalar_lea.vmem [#allocation9], %s690
          %s693 = ssub.s32 128, 128
          %694 = vsyncadd %s688, %s693
          %s695 = smul.addr %s46, 128
          %s696 = scalar_lea.hbm %s1, %s695
          %s698 = sshll.u32 %s691, 4
          %s699 = int_to_ptr.vmem [resolvable:$true] %s698
          %701 = dma.hbm_to_vmem [thread:$0]  %s696, 128, %s699, %s688
        $region100: #{tpu_custom_call.1} parent=91 // pred_fallthru
          _
      $region92: #{tpu_custom_call.1} parent=5 // pred_fallthru
        _
      %p702 = scmp.le.s32.totalorder 1, %s39
      %p703 = scmp.lt.s32.totalorder %s39, 3
      %p704 = pnand %p702, %p703
      %p705 = pneg %p704
      // Predicated region
      $region101: #{tpu_custom_call.1} parent=5 // pred_check
        _
      $region102: #{tpu_custom_call.1} parent=5 // pred_check_branch
        %707 = sbr.rel (%p704) target = $region104
      $region103: #{tpu_custom_call.1} parent=5 // pred_region
        %s708 = ssub.s32 %s39, 1
        %s709 = sand.u32 %s64, 1
        %s710 = scalar_lea.sflag [#allocation7], %s709
        %s711 = sand.u32 %s64, 1
        %s712 = smul.addr %s711, 8
        %s713 = scalar_lea.vmem [#allocation6], %s712
        // Predicated region
        $region105: #{tpu_custom_call.1} parent=103 // pred_check
          %p714 = pneg %p77
        $region106: #{tpu_custom_call.1} parent=103 // pred_check_branch
          %716 = sbr.rel (%p714) target = $region108
        $region107: #{tpu_custom_call.1} parent=103 // pred_region
          %717 = dma.done %s710, 128
        $region108: #{tpu_custom_call.1} parent=103 // pred_fallthru
          _
        %s718 = sand.u32 %s44, 1
        %s719 = scalar_lea.sflag [#allocation10], %s718
        %s720 = sand.u32 %s90, 1
        %s721 = smul.addr %s720, 8
        %s722 = scalar_lea.vmem [#allocation9], %s721
        // Predicated region
        $region109: #{tpu_custom_call.1} parent=103 // pred_check
          %p723 = pneg %p103
        $region110: #{tpu_custom_call.1} parent=103 // pred_check_branch
          %725 = sbr.rel (%p723) target = $region112
        $region111: #{tpu_custom_call.1} parent=103 // pred_region
          %726 = dma.done %s719, 128
        $region112: #{tpu_custom_call.1} parent=103 // pred_fallthru
          _
        // Predicated region
        $region113: #{tpu_custom_call.1} parent=103 // pred_check
          %p727 = pneg %p124
        $region114: #{tpu_custom_call.1} parent=103 // pred_check_branch
          %729 = sbr.rel (%p727) target = $region116
        $region115: #{tpu_custom_call.1} parent=103 // pred_region
          %730 = dma.done [#allocation10], 2048
        $region116: #{tpu_custom_call.1} parent=103 // pred_fallthru
          _
        // Predicated region
        $region117: #{tpu_custom_call.1} parent=103 // pred_check
          %p731 = pneg %p166
        $region118: #{tpu_custom_call.1} parent=103 // pred_check_branch
          %733 = sbr.rel (%p731) target = $region120
        $region119: #{tpu_custom_call.1} parent=103 // pred_region
          %734 = dma.done [#allocation13], 2048
        $region120: #{tpu_custom_call.1} parent=103 // pred_fallthru
          _
        // Predicated region
        $region121: #{tpu_custom_call.1} parent=103 // pred_check
          %p735 = pneg %p208
        $region122: #{tpu_custom_call.1} parent=103 // pred_check_branch
          %737 = sbr.rel (%p735) target = $region124
        $region123: #{tpu_custom_call.1} parent=103 // pred_region
          %738 = dma.done [#allocation13], 4096
        $region124: #{tpu_custom_call.1} parent=103 // pred_fallthru
          _
        // Predicated region
        $region125: #{tpu_custom_call.1} parent=103 // pred_check
          %p739 = pneg %p250
        $region126: #{tpu_custom_call.1} parent=103 // pred_check_branch
          %741 = sbr.rel (%p739) target = $region128
        $region127: #{tpu_custom_call.1} parent=103 // pred_region
          %742 = dma.done [#allocation16], 4096
        $region128: #{tpu_custom_call.1} parent=103 // pred_fallthru
          _
        // Predicated region
        $region129: #{tpu_custom_call.1} parent=103 // pred_check
          %p743 = pneg %p292
        $region130: #{tpu_custom_call.1} parent=103 // pred_check_branch
          %745 = sbr.rel (%p743) target = $region132
        $region131: #{tpu_custom_call.1} parent=103 // pred_region
          %746 = dma.done [#allocation16], 2048
        $region132: #{tpu_custom_call.1} parent=103 // pred_fallthru
          _
        // Predicated region
        $region133: #{tpu_custom_call.1} parent=103 // pred_check
          %p747 = pneg %p313
        $region134: #{tpu_custom_call.1} parent=103 // pred_check_branch
          %749 = sbr.rel (%p747) target = $region136
        $region135: #{tpu_custom_call.1} parent=103 // pred_region
          %750 = dma.done [#allocation19], 2048
        $region136: #{tpu_custom_call.1} parent=103 // pred_fallthru
          _
        %s751 = sand.u32 %s64, 1
        %s752 = scalar_lea.sflag [#allocation7], %s751
        %s753 = sand.u32 %s64, 1
        %s754 = smul.addr %s753, 8
        %s755 = scalar_lea.vmem [#allocation6], %s754
        %p756 = pneg %p77
        %p757 = pneg %p74
        %s758 = sand.u32 %s44, 1
        %s759 = scalar_lea.sflag [#allocation10], %s758
        %s760 = sand.u32 %s90, 1
        %s761 = smul.addr %s760, 8
        %s762 = scalar_lea.vmem [#allocation9], %s761
        %p763 = pneg %p103
        %p764 = pneg %p100
        %p765 = pneg %p124
        %p766 = pneg %p121
        %p767 = pneg %p145
        %p768 = pneg %p142
        %p769 = pneg %p166
        %p770 = pneg %p163
        %p771 = pneg %p187
        %p772 = pneg %p184
        %p773 = pneg %p208
        %p774 = pneg %p205
        %p775 = pneg %p229
        %p776 = pneg %p226
        %p777 = pneg %p250
        %p778 = pneg %p247
        %p779 = pneg %p271
        %p780 = pneg %p268
        %p781 = pneg %p292
        %p782 = pneg %p289
        %p783 = pneg %p313
        %p784 = pneg %p310
        %p785 = pneg %p334
        %p786 = pneg %p331
        %p787 = pneg %p355
        %p788 = pneg %p352
        %p789 = pneg %p376
        %p790 = pneg %p373
        %p791 = pneg %p397
        %p792 = pneg %p394
        %p793 = pneg %p418
        %p794 = pneg %p415
        %p795 = pneg %p439
        %p796 = pneg %p436
        %p797 = pneg %p460
        %p798 = pneg %p457
        %p799 = pneg %p481
        %p800 = pneg %p478
        %p801 = pneg %p502
        %p802 = pneg %p499
        %p803 = pneg %p530
        %p804 = pneg %p527
        %s805 = sand.u32 %s517, 1
        %s806 = scalar_lea.sflag [#allocation8], %s805
        %s807 = sand.u32 %s517, 1
        %s808 = smul.addr %s807, 8
        %s809 = scalar_lea.vmem [#allocation20], %s808
        %p810 = scmp.eq.s32.totalorder %s49, 0
        // Predicated region
        $region137: #{tpu_custom_call.1} parent=103 // pred_check
          %p811 = pneg %p810
        $region138: #{tpu_custom_call.1} parent=103 // pred_check_branch
          %813 = sbr.rel (%p811) target = $region140
        $region139: #{tpu_custom_call.1} parent=103 // pred_region
          %v814 = vld [vmem:[%s722] sm:$0xff]
          %v815 = vld [vmem:[#allocation14] sm:$0xff]
          %v816 = vld [vmem:[#allocation14 + $0x8] sm:$0xff]
          %v817 = vld [vmem:[#allocation14 + $0x10] sm:$0xff]
          %v818 = vld [vmem:[#allocation14 + $0x18] sm:$0xff]
          %v819 = vld [vmem:[#allocation14 + $0x20] sm:$0xff]
          %v820 = vld [vmem:[#allocation14 + $0x28] sm:$0xff]
          %v821 = vld [vmem:[#allocation14 + $0x30] sm:$0xff]
          %v822 = vld [vmem:[#allocation14 + $0x38] sm:$0xff]
          %v823 = vld [vmem:[#allocation14 + $0x40] sm:$0xff]
          %v824 = vld [vmem:[#allocation14 + $0x48] sm:$0xff]
          %v825 = vld [vmem:[#allocation14 + $0x50] sm:$0xff]
          %v826 = vld [vmem:[#allocation14 + $0x58] sm:$0xff]
          %v827 = vld [vmem:[#allocation14 + $0x60] sm:$0xff]
          %v828 = vld [vmem:[#allocation14 + $0x68] sm:$0xff]
          %v829 = vld [vmem:[#allocation14 + $0x70] sm:$0xff]
          %v830 = vld [vmem:[#allocation14 + $0x78] sm:$0xff]
          %v831 = vld [vmem:[#allocation14 + $0x80] sm:$0xff]
          %v832 = vld [vmem:[#allocation14 + $0x88] sm:$0xff]
          %v833 = vld [vmem:[#allocation14 + $0x90] sm:$0xff]
          %v834 = vld [vmem:[#allocation14 + $0x98] sm:$0xff]
          %v835 = vld [vmem:[#allocation14 + $0xa0] sm:$0xff]
          %v836 = vld [vmem:[#allocation14 + $0xa8] sm:$0xff]
          %v837 = vld [vmem:[#allocation14 + $0xb0] sm:$0xff]
          %v838 = vld [vmem:[#allocation14 + $0xb8] sm:$0xff]
          %v839 = vld [vmem:[#allocation14 + $0xc0] sm:$0xff]
          %v840 = vld [vmem:[#allocation14 + $0xc8] sm:$0xff]
          %v841 = vld [vmem:[#allocation14 + $0xd0] sm:$0xff]
          %v842 = vld [vmem:[#allocation14 + $0xd8] sm:$0xff]
          %v843 = vld [vmem:[#allocation14 + $0xe0] sm:$0xff]
          %v844 = vld [vmem:[#allocation14 + $0xe8] sm:$0xff]
          %v845 = vld [vmem:[#allocation14 + $0xf0] sm:$0xff]
          %v846 = vld [vmem:[#allocation14 + $0xf8] sm:$0xff]
          %v847 = vld [vmem:[%s7] sm:$0x3]
          %v849 = vlaneseq
          %v850 = vshrl.u32 %v849, 7
          %v851 = vsub.s32 0, %v850
          %v852 = vrot.slane %v847, %v851
          %v853 = vlaneseq
          %v854 = vshrl.u32 %v853, 7
          %v855 = vsub.s32 1, %v854
          %v856 = vrot.slane %v847, %v855
          %859 = vmatprep.subr.mxu0 %v846
          %860 = vmatpush1.msra.mxu0 %v845
          %861 = vmatprep.subr.mxu0 %v844
          %862 = vmatpush1.msra.mxu0 %v843
          %863 = vmatprep.subr.mxu0 %v842
          %864 = vmatpush1.msra.mxu0 %v841
          %865 = vmatprep.subr.mxu0 %v840
          %866 = vmatpush1.msra.mxu0 %v839
          %867 = vmatprep.subr.mxu0 %v838
          %868 = vmatpush1.msra.mxu0 %v837
          %869 = vmatprep.subr.mxu0 %v836
          %870 = vmatpush1.msra.mxu0 %v835
          %871 = vmatprep.subr.mxu0 %v834
          %872 = vmatpush1.msra.mxu0 %v833
          %873 = vmatprep.subr.mxu0 %v832
          %874 = vmatpush1.msra.mxu0 %v831
          %875 = vmatprep.subr.mxu0 %v830
          %876 = vmatpush1.msra.mxu0 %v829
          %877 = vmatprep.subr.mxu0 %v828
          %878 = vmatpush1.msra.mxu0 %v827
          %879 = vmatprep.subr.mxu0 %v826
          %880 = vmatpush1.msra.mxu0 %v825
          %881 = vmatprep.subr.mxu0 %v824
          %882 = vmatpush1.msra.mxu0 %v823
          %883 = vmatprep.subr.mxu0 %v822
          %884 = vmatpush1.msra.mxu0 %v821
          %885 = vmatprep.subr.mxu0 %v820
          %886 = vmatpush1.msra.mxu0 %v819
          %887 = vmatprep.subr.mxu0 %v818
          %888 = vmatpush1.msra.mxu0 %v817
          %889 = vmatprep.subr.mxu0 %v816
          %890 = vmatpush1.msra.mxu0 %v815
          %891 = vmatprep.subr.mxu0 0.0
          %892 = vmatpush2.msra.mxu0 0.0
          %893 = vmatprep.subr.mxu0 0.0
          %894 = vmatpush2.msra.mxu0 0.0
          %895 = vmatprep.subr.mxu0 0.0
          %896 = vmatpush2.msra.mxu0 0.0
          %897 = vmatprep.subr.mxu0 0.0
          %898 = vmatpush2.msra.mxu0 0.0
          %899 = vmatprep.subr.mxu0 0.0
          %900 = vmatpush2.msra.mxu0 0.0
          %901 = vmatprep.subr.mxu0 0.0
          %902 = vmatpush2.msra.mxu0 0.0
          %903 = vmatprep.subr.mxu0 0.0
          %904 = vmatpush2.msra.mxu0 0.0
          %905 = vmatprep.subr.mxu0 0.0
          %906 = vmatpush2.msra.mxu0 0.0
          %907 = vmatprep.subr.mxu0 0.0
          %908 = vmatpush2.msra.mxu0 0.0
          %909 = vmatprep.subr.mxu0 0.0
          %910 = vmatpush2.msra.mxu0 0.0
          %911 = vmatprep.subr.mxu0 0.0
          %912 = vmatpush2.msra.mxu0 0.0
          %913 = vmatprep.subr.mxu0 0.0
          %914 = vmatpush2.msra.mxu0 0.0
          %915 = vmatprep.subr.mxu0 0.0
          %916 = vmatpush2.msra.mxu0 0.0
          %917 = vmatprep.subr.mxu0 0.0
          %918 = vmatpush2.msra.mxu0 0.0
          %919 = vmatprep.subr.mxu0 0.0
          %920 = vmatpush2.msra.mxu0 0.0
          %921 = vmatprep.subr.mxu0 0.0
          %922 = vmatpush2.msra.mxu0 0.0
          %923 = vmatprep.mubr.f32.mxu0 0.0
          %924 = vmatmul.mubr.f32.gmra.mxu0 %v814
          %v925 = vpop.f32.mrf.mxu0
          %v926 = vadd.f32 %v852, %v925
          %v927 = vpop.f32.mrf.mxu0
          %v928 = vadd.f32 %v856, %v927
          %929 = vdwg.mxu0
          %v930 = vld [vmem:[%s15] sm:$0x1]
          %v931 = vld [vmem:[%s16] sm:$0x1]
          %932 = vadd.xlane.f32.xlu0 %v926
          %v933 = vpop.xlane.xlu0 %932
          %v934 = vmul.f32 %v933, 0.03125
          %v935 = vmul.f32 %v926, %v926
          %936 = vadd.xlane.f32.xlu0 %v935
          %v937 = vpop.xlane.xlu0 %936
          %v938 = vmul.f32 %v937, 0.03125
          %v939 = vmul.f32 %v934, %v934
          %v940 = vsub.f32 %v938, %v939
          %v941 = vsub.f32 %v926, %v934
          %v942 = vadd.f32 %v940, 1e-05
          %v943 = vrsqrt.pop %v942
          %v944 = vmul.f32 %v941, %v943
          %v946 = vlaneseq
          %v947 = vshrl.u32 %v946, 7
          %v948 = vsub.s32 0, %v947
          %v949 = vrot.slane %v930, %v948
          %v951 = vmul.f32 %v944, %v949
          %v953 = vlaneseq
          %v954 = vshrl.u32 %v953, 7
          %v955 = vsub.s32 0, %v954
          %v956 = vrot.slane %v931, %v955
          %v958 = vadd.f32 %v951, %v956
          %959 = vst [vmem:[#allocation2] sm:$0xff] %v958
          %960 = vst [vmem:[#allocation3] sm:$0xff] %v928
          %v961 = vld [vmem:[%s713] sm:$0xff]
          %v962 = vld [vmem:[#allocation15] sm:$0xff]
          %v963 = vld [vmem:[#allocation15 + $0x8] sm:$0xff]
          %v964 = vld [vmem:[#allocation15 + $0x10] sm:$0xff]
          %v965 = vld [vmem:[#allocation15 + $0x18] sm:$0xff]
          %v966 = vld [vmem:[#allocation15 + $0x20] sm:$0xff]
          %v967 = vld [vmem:[#allocation15 + $0x28] sm:$0xff]
          %v968 = vld [vmem:[#allocation15 + $0x30] sm:$0xff]
          %v969 = vld [vmem:[#allocation15 + $0x38] sm:$0xff]
          %v970 = vld [vmem:[#allocation15 + $0x40] sm:$0xff]
          %v971 = vld [vmem:[#allocation15 + $0x48] sm:$0xff]
          %v972 = vld [vmem:[#allocation15 + $0x50] sm:$0xff]
          %v973 = vld [vmem:[#allocation15 + $0x58] sm:$0xff]
          %v974 = vld [vmem:[#allocation15 + $0x60] sm:$0xff]
          %v975 = vld [vmem:[#allocation15 + $0x68] sm:$0xff]
          %v976 = vld [vmem:[#allocation15 + $0x70] sm:$0xff]
          %v977 = vld [vmem:[#allocation15 + $0x78] sm:$0xff]
          %v978 = vld [vmem:[#allocation15 + $0x80] sm:$0xff]
          %v979 = vld [vmem:[#allocation15 + $0x88] sm:$0xff]
          %v980 = vld [vmem:[#allocation15 + $0x90] sm:$0xff]
          %v981 = vld [vmem:[#allocation15 + $0x98] sm:$0xff]
          %v982 = vld [vmem:[#allocation15 + $0xa0] sm:$0xff]
          %v983 = vld [vmem:[#allocation15 + $0xa8] sm:$0xff]
          %v984 = vld [vmem:[#allocation15 + $0xb0] sm:$0xff]
          %v985 = vld [vmem:[#allocation15 + $0xb8] sm:$0xff]
          %v986 = vld [vmem:[#allocation15 + $0xc0] sm:$0xff]
          %v987 = vld [vmem:[#allocation15 + $0xc8] sm:$0xff]
          %v988 = vld [vmem:[#allocation15 + $0xd0] sm:$0xff]
          %v989 = vld [vmem:[#allocation15 + $0xd8] sm:$0xff]
          %v990 = vld [vmem:[#allocation15 + $0xe0] sm:$0xff]
          %v991 = vld [vmem:[#allocation15 + $0xe8] sm:$0xff]
          %v992 = vld [vmem:[#allocation15 + $0xf0] sm:$0xff]
          %v993 = vld [vmem:[#allocation15 + $0xf8] sm:$0xff]
          %v994 = vld [vmem:[%s9] sm:$0x3]
          %v996 = vlaneseq
          %v997 = vshrl.u32 %v996, 7
          %v998 = vsub.s32 0, %v997
          %v999 = vrot.slane %v994, %v998
          %v1000 = vlaneseq
          %v1001 = vshrl.u32 %v1000, 7
          %v1002 = vsub.s32 1, %v1001
          %v1003 = vrot.slane %v994, %v1002
          %1006 = vmatprep.subr.mxu0 %v993
          %1007 = vmatpush1.msra.mxu0 %v992
          %1008 = vmatprep.subr.mxu0 %v991
          %1009 = vmatpush1.msra.mxu0 %v990
          %1010 = vmatprep.subr.mxu0 %v989
          %1011 = vmatpush1.msra.mxu0 %v988
          %1012 = vmatprep.subr.mxu0 %v987
          %1013 = vmatpush1.msra.mxu0 %v986
          %1014 = vmatprep.subr.mxu0 %v985
          %1015 = vmatpush1.msra.mxu0 %v984
          %1016 = vmatprep.subr.mxu0 %v983
          %1017 = vmatpush1.msra.mxu0 %v982
          %1018 = vmatprep.subr.mxu0 %v981
          %1019 = vmatpush1.msra.mxu0 %v980
          %1020 = vmatprep.subr.mxu0 %v979
          %1021 = vmatpush1.msra.mxu0 %v978
          %1022 = vmatprep.subr.mxu0 %v977
          %1023 = vmatpush1.msra.mxu0 %v976
          %1024 = vmatprep.subr.mxu0 %v975
          %1025 = vmatpush1.msra.mxu0 %v974
          %1026 = vmatprep.subr.mxu0 %v973
          %1027 = vmatpush1.msra.mxu0 %v972
          %1028 = vmatprep.subr.mxu0 %v971
          %1029 = vmatpush1.msra.mxu0 %v970
          %1030 = vmatprep.subr.mxu0 %v969
          %1031 = vmatpush1.msra.mxu0 %v968
          %1032 = vmatprep.subr.mxu0 %v967
          %1033 = vmatpush1.msra.mxu0 %v966
          %1034 = vmatprep.subr.mxu0 %v965
          %1035 = vmatpush1.msra.mxu0 %v964
          %1036 = vmatprep.subr.mxu0 %v963
          %1037 = vmatpush1.msra.mxu0 %v962
          %1038 = vmatprep.subr.mxu0 0.0
          %1039 = vmatpush2.msra.mxu0 0.0
          %1040 = vmatprep.subr.mxu0 0.0
          %1041 = vmatpush2.msra.mxu0 0.0
          %1042 = vmatprep.subr.mxu0 0.0
          %1043 = vmatpush2.msra.mxu0 0.0
          %1044 = vmatprep.subr.mxu0 0.0
          %1045 = vmatpush2.msra.mxu0 0.0
          %1046 = vmatprep.subr.mxu0 0.0
          %1047 = vmatpush2.msra.mxu0 0.0
          %1048 = vmatprep.subr.mxu0 0.0
          %1049 = vmatpush2.msra.mxu0 0.0
          %1050 = vmatprep.subr.mxu0 0.0
          %1051 = vmatpush2.msra.mxu0 0.0
          %1052 = vmatprep.subr.mxu0 0.0
          %1053 = vmatpush2.msra.mxu0 0.0
          %1054 = vmatprep.subr.mxu0 0.0
          %1055 = vmatpush2.msra.mxu0 0.0
          %1056 = vmatprep.subr.mxu0 0.0
          %1057 = vmatpush2.msra.mxu0 0.0
          %1058 = vmatprep.subr.mxu0 0.0
          %1059 = vmatpush2.msra.mxu0 0.0
          %1060 = vmatprep.subr.mxu0 0.0
          %1061 = vmatpush2.msra.mxu0 0.0
          %1062 = vmatprep.subr.mxu0 0.0
          %1063 = vmatpush2.msra.mxu0 0.0
          %1064 = vmatprep.subr.mxu0 0.0
          %1065 = vmatpush2.msra.mxu0 0.0
          %1066 = vmatprep.subr.mxu0 0.0
          %1067 = vmatpush2.msra.mxu0 0.0
          %1068 = vmatprep.subr.mxu0 0.0
          %1069 = vmatpush2.msra.mxu0 0.0
          %1070 = vmatprep.mubr.f32.mxu0 0.0
          %1071 = vmatmul.mubr.f32.gmra.mxu0 %v961
          %v1072 = vpop.f32.mrf.mxu0
          %v1073 = vadd.f32 %v999, %v1072
          %v1074 = vpop.f32.mrf.mxu0
          %v1075 = vadd.f32 %v1003, %v1074
          %1076 = vdwg.mxu0
          %v1077 = vld [vmem:[%s13] sm:$0x1]
          %v1078 = vld [vmem:[%s14] sm:$0x1]
          %1079 = vadd.xlane.f32.xlu0 %v1073
          %v1080 = vpop.xlane.xlu0 %1079
          %v1081 = vmul.f32 %v1080, 0.03125
          %v1082 = vmul.f32 %v1073, %v1073
          %1083 = vadd.xlane.f32.xlu0 %v1082
          %v1084 = vpop.xlane.xlu0 %1083
          %v1085 = vmul.f32 %v1084, 0.03125
          %v1086 = vmul.f32 %v1081, %v1081
          %v1087 = vsub.f32 %v1085, %v1086
          %v1088 = vsub.f32 %v1073, %v1081
          %v1089 = vadd.f32 %v1087, 1e-05
          %v1090 = vrsqrt.pop %v1089
          %v1091 = vmul.f32 %v1088, %v1090
          %v1093 = vlaneseq
          %v1094 = vshrl.u32 %v1093, 7
          %v1095 = vsub.s32 0, %v1094
          %v1096 = vrot.slane %v1077, %v1095
          %v1098 = vmul.f32 %v1091, %v1096
          %v1100 = vlaneseq
          %v1101 = vshrl.u32 %v1100, 7
          %v1102 = vsub.s32 0, %v1101
          %v1103 = vrot.slane %v1078, %v1102
          %v1105 = vadd.f32 %v1098, %v1103
          %1106 = vst [vmem:[#allocation4] sm:$0xff] %v1105
          %1107 = vst [vmem:[#allocation5] sm:$0xff] %v1075
        $region140: #{tpu_custom_call.1} parent=103 // pred_fallthru
          _
        %s1108 = smul.u32 %s49, 8
        %s1109 = scalar_lea.vmem %s713, %s1108 [#allocation6]
        %v1110 = vld [vmem:[%s1109] sm:$0xff]
        %s1111 = scalar_lea.vmem %s722, %s1108 [#allocation9]
        %v1112 = vld [vmem:[%s1111] sm:$0xff]
        %v1113 = vld [vmem:[#allocation11] sm:$0xff]
        %v1114 = vld [vmem:[#allocation11 + $0x8] sm:$0xff]
        %v1115 = vld [vmem:[#allocation11 + $0x10] sm:$0xff]
        %v1116 = vld [vmem:[#allocation11 + $0x18] sm:$0xff]
        %v1117 = vld [vmem:[#allocation11 + $0x20] sm:$0xff]
        %v1118 = vld [vmem:[#allocation11 + $0x28] sm:$0xff]
        %v1119 = vld [vmem:[#allocation11 + $0x30] sm:$0xff]
        %v1120 = vld [vmem:[#allocation11 + $0x38] sm:$0xff]
        %v1121 = vld [vmem:[#allocation11 + $0x40] sm:$0xff]
        %v1122 = vld [vmem:[#allocation11 + $0x48] sm:$0xff]
        %v1123 = vld [vmem:[#allocation11 + $0x50] sm:$0xff]
        %v1124 = vld [vmem:[#allocation11 + $0x58] sm:$0xff]
        %v1125 = vld [vmem:[#allocation11 + $0x60] sm:$0xff]
        %v1126 = vld [vmem:[#allocation11 + $0x68] sm:$0xff]
        %v1127 = vld [vmem:[#allocation11 + $0x70] sm:$0xff]
        %v1128 = vld [vmem:[#allocation11 + $0x78] sm:$0xff]
        %v1129 = vld [vmem:[%s3] sm:$0x1]
        %v1131 = vlaneseq
        %v1132 = vshrl.u32 %v1131, 7
        %v1133 = vsub.s32 0, %v1132
        %v1134 = vrot.slane %v1129, %v1133
        %1136 = vmatprep.subr.mxu0 0.0
        %1137 = vmatpush1.msra.mxu0 %v1128
        %1138 = vmatprep.subr.mxu0 0.0
        %1139 = vmatpush1.msra.mxu0 %v1127
        %1140 = vmatprep.subr.mxu0 0.0
        %1141 = vmatpush1.msra.mxu0 %v1126
        %1142 = vmatprep.subr.mxu0 0.0
        %1143 = vmatpush1.msra.mxu0 %v1125
        %1144 = vmatprep.subr.mxu0 0.0
        %1145 = vmatpush1.msra.mxu0 %v1124
        %1146 = vmatprep.subr.mxu0 0.0
        %1147 = vmatpush1.msra.mxu0 %v1123
        %1148 = vmatprep.subr.mxu0 0.0
        %1149 = vmatpush1.msra.mxu0 %v1122
        %1150 = vmatprep.subr.mxu0 0.0
        %1151 = vmatpush1.msra.mxu0 %v1121
        %1152 = vmatprep.subr.mxu0 0.0
        %1153 = vmatpush1.msra.mxu0 %v1120
        %1154 = vmatprep.subr.mxu0 0.0
        %1155 = vmatpush1.msra.mxu0 %v1119
        %1156 = vmatprep.subr.mxu0 0.0
        %1157 = vmatpush1.msra.mxu0 %v1118
        %1158 = vmatprep.subr.mxu0 0.0
        %1159 = vmatpush1.msra.mxu0 %v1117
        %1160 = vmatprep.subr.mxu0 0.0
        %1161 = vmatpush1.msra.mxu0 %v1116
        %1162 = vmatprep.subr.mxu0 0.0
        %1163 = vmatpush1.msra.mxu0 %v1115
        %1164 = vmatprep.subr.mxu0 0.0
        %1165 = vmatpush1.msra.mxu0 %v1114
        %1166 = vmatprep.subr.mxu0 0.0
        %1167 = vmatpush1.msra.mxu0 %v1113
        %1168 = vmatprep.subr.mxu0 0.0
        %1169 = vmatpush2.msra.mxu0 0.0
        %1170 = vmatprep.subr.mxu0 0.0
        %1171 = vmatpush2.msra.mxu0 0.0
        %1172 = vmatprep.subr.mxu0 0.0
        %1173 = vmatpush2.msra.mxu0 0.0
        %1174 = vmatprep.subr.mxu0 0.0
        %1175 = vmatpush2.msra.mxu0 0.0
        %1176 = vmatprep.subr.mxu0 0.0
        %1177 = vmatpush2.msra.mxu0 0.0
        %1178 = vmatprep.subr.mxu0 0.0
        %1179 = vmatpush2.msra.mxu0 0.0
        %1180 = vmatprep.subr.mxu0 0.0
        %1181 = vmatpush2.msra.mxu0 0.0
        %1182 = vmatprep.subr.mxu0 0.0
        %1183 = vmatpush2.msra.mxu0 0.0
        %1184 = vmatprep.subr.mxu0 0.0
        %1185 = vmatpush2.msra.mxu0 0.0
        %1186 = vmatprep.subr.mxu0 0.0
        %1187 = vmatpush2.msra.mxu0 0.0
        %1188 = vmatprep.subr.mxu0 0.0
        %1189 = vmatpush2.msra.mxu0 0.0
        %1190 = vmatprep.subr.mxu0 0.0
        %1191 = vmatpush2.msra.mxu0 0.0
        %1192 = vmatprep.subr.mxu0 0.0
        %1193 = vmatpush2.msra.mxu0 0.0
        %1194 = vmatprep.subr.mxu0 0.0
        %1195 = vmatpush2.msra.mxu0 0.0
        %1196 = vmatprep.subr.mxu0 0.0
        %1197 = vmatpush2.msra.mxu0 0.0
        %1198 = vmatprep.subr.mxu0 0.0
        %1199 = vmatpush2.msra.mxu0 0.0
        %1200 = vmatprep.mubr.f32.mxu0 0.0
        %1201 = vmatmul.mubr.f32.gmra.mxu0 %v1110
        %v1202 = vpop.f32.mrf.mxu0
        %v1203 = vadd.f32 %v1134, %v1202
        %v1204 = vpop.f32.mrf.mxu0
        %1205 = vdwg.mxu0
        %v1206 = vld [vmem:[%s17] sm:$0x1]
        %v1207 = vld [vmem:[%s18] sm:$0x1]
        %1208 = vadd.xlane.f32.xlu0 %v1203
        %v1209 = vpop.xlane.xlu0 %1208
        %v1210 = vmul.f32 %v1209, 0.03125
        %v1211 = vmul.f32 %v1203, %v1203
        %1212 = vadd.xlane.f32.xlu0 %v1211
        %v1213 = vpop.xlane.xlu0 %1212
        %v1214 = vmul.f32 %v1213, 0.03125
        %v1215 = vmul.f32 %v1210, %v1210
        %v1216 = vsub.f32 %v1214, %v1215
        %v1217 = vsub.f32 %v1203, %v1210
        %v1218 = vadd.f32 %v1216, 1e-05
        %v1219 = vrsqrt.pop %v1218
        %v1220 = vmul.f32 %v1217, %v1219
        %v1222 = vlaneseq
        %v1223 = vshrl.u32 %v1222, 7
        %v1224 = vsub.s32 0, %v1223
        %v1225 = vrot.slane %v1206, %v1224
        %v1227 = vmul.f32 %v1220, %v1225
        %v1229 = vlaneseq
        %v1230 = vshrl.u32 %v1229, 7
        %v1231 = vsub.s32 0, %v1230
        %v1232 = vrot.slane %v1207, %v1231
        %v1234 = vadd.f32 %v1227, %v1232
        %v1235 = vld [vmem:[#allocation12] sm:$0xff]
        %v1236 = vld [vmem:[#allocation12 + $0x8] sm:$0xff]
        %v1237 = vld [vmem:[#allocation12 + $0x10] sm:$0xff]
        %v1238 = vld [vmem:[#allocation12 + $0x18] sm:$0xff]
        %v1239 = vld [vmem:[#allocation12 + $0x20] sm:$0xff]
        %v1240 = vld [vmem:[#allocation12 + $0x28] sm:$0xff]
        %v1241 = vld [vmem:[#allocation12 + $0x30] sm:$0xff]
        %v1242 = vld [vmem:[#allocation12 + $0x38] sm:$0xff]
        %v1243 = vld [vmem:[#allocation12 + $0x40] sm:$0xff]
        %v1244 = vld [vmem:[#allocation12 + $0x48] sm:$0xff]
        %v1245 = vld [vmem:[#allocation12 + $0x50] sm:$0xff]
        %v1246 = vld [vmem:[#allocation12 + $0x58] sm:$0xff]
        %v1247 = vld [vmem:[#allocation12 + $0x60] sm:$0xff]
        %v1248 = vld [vmem:[#allocation12 + $0x68] sm:$0xff]
        %v1249 = vld [vmem:[#allocation12 + $0x70] sm:$0xff]
        %v1250 = vld [vmem:[#allocation12 + $0x78] sm:$0xff]
        %v1251 = vld [vmem:[%s5] sm:$0x1]
        %v1253 = vlaneseq
        %v1254 = vshrl.u32 %v1253, 7
        %v1255 = vsub.s32 0, %v1254
        %v1256 = vrot.slane %v1251, %v1255
        %1258 = vmatprep.subr.mxu0 0.0
        %1259 = vmatpush1.msra.mxu0 %v1250
        %1260 = vmatprep.subr.mxu0 0.0
        %1261 = vmatpush1.msra.mxu0 %v1249
        %1262 = vmatprep.subr.mxu0 0.0
        %1263 = vmatpush1.msra.mxu0 %v1248
        %1264 = vmatprep.subr.mxu0 0.0
        %1265 = vmatpush1.msra.mxu0 %v1247
        %1266 = vmatprep.subr.mxu0 0.0
        %1267 = vmatpush1.msra.mxu0 %v1246
        %1268 = vmatprep.subr.mxu0 0.0
        %1269 = vmatpush1.msra.mxu0 %v1245
        %1270 = vmatprep.subr.mxu0 0.0
        %1271 = vmatpush1.msra.mxu0 %v1244
        %1272 = vmatprep.subr.mxu0 0.0
        %1273 = vmatpush1.msra.mxu0 %v1243
        %1274 = vmatprep.subr.mxu0 0.0
        %1275 = vmatpush1.msra.mxu0 %v1242
        %1276 = vmatprep.subr.mxu0 0.0
        %1277 = vmatpush1.msra.mxu0 %v1241
        %1278 = vmatprep.subr.mxu0 0.0
        %1279 = vmatpush1.msra.mxu0 %v1240
        %1280 = vmatprep.subr.mxu0 0.0
        %1281 = vmatpush1.msra.mxu0 %v1239
        %1282 = vmatprep.subr.mxu0 0.0
        %1283 = vmatpush1.msra.mxu0 %v1238
        %1284 = vmatprep.subr.mxu0 0.0
        %1285 = vmatpush1.msra.mxu0 %v1237
        %1286 = vmatprep.subr.mxu0 0.0
        %1287 = vmatpush1.msra.mxu0 %v1236
        %1288 = vmatprep.subr.mxu0 0.0
        %1289 = vmatpush1.msra.mxu0 %v1235
        %1290 = vmatprep.subr.mxu0 0.0
        %1291 = vmatpush2.msra.mxu0 0.0
        %1292 = vmatprep.subr.mxu0 0.0
        %1293 = vmatpush2.msra.mxu0 0.0
        %1294 = vmatprep.subr.mxu0 0.0
        %1295 = vmatpush2.msra.mxu0 0.0
        %1296 = vmatprep.subr.mxu0 0.0
        %1297 = vmatpush2.msra.mxu0 0.0
        %1298 = vmatprep.subr.mxu0 0.0
        %1299 = vmatpush2.msra.mxu0 0.0
        %1300 = vmatprep.subr.mxu0 0.0
        %1301 = vmatpush2.msra.mxu0 0.0
        %1302 = vmatprep.subr.mxu0 0.0
        %1303 = vmatpush2.msra.mxu0 0.0
        %1304 = vmatprep.subr.mxu0 0.0
        %1305 = vmatpush2.msra.mxu0 0.0
        %1306 = vmatprep.subr.mxu0 0.0
        %1307 = vmatpush2.msra.mxu0 0.0
        %1308 = vmatprep.subr.mxu0 0.0
        %1309 = vmatpush2.msra.mxu0 0.0
        %1310 = vmatprep.subr.mxu0 0.0
        %1311 = vmatpush2.msra.mxu0 0.0
        %1312 = vmatprep.subr.mxu0 0.0
        %1313 = vmatpush2.msra.mxu0 0.0
        %1314 = vmatprep.subr.mxu0 0.0
        %1315 = vmatpush2.msra.mxu0 0.0
        %1316 = vmatprep.subr.mxu0 0.0
        %1317 = vmatpush2.msra.mxu0 0.0
        %1318 = vmatprep.subr.mxu0 0.0
        %1319 = vmatpush2.msra.mxu0 0.0
        %1320 = vmatprep.subr.mxu0 0.0
        %1321 = vmatpush2.msra.mxu0 0.0
        %1322 = vmatprep.mubr.f32.mxu0 0.0
        %1323 = vmatmul.mubr.f32.gmra.mxu0 %v1112
        %v1324 = vpop.f32.mrf.mxu0
        %v1325 = vadd.f32 %v1256, %v1324
        %v1326 = vpop.f32.mrf.mxu0
        %1327 = vdwg.mxu0
        %v1328 = vld [vmem:[%s19] sm:$0x1]
        %v1329 = vld [vmem:[%s20] sm:$0x1]
        %1330 = vadd.xlane.f32.xlu0 %v1325
        %v1331 = vpop.xlane.xlu0 %1330
        %v1332 = vmul.f32 %v1331, 0.03125
        %v1333 = vmul.f32 %v1325, %v1325
        %1334 = vadd.xlane.f32.xlu0 %v1333
        %v1335 = vpop.xlane.xlu0 %1334
        %v1336 = vmul.f32 %v1335, 0.03125
        %v1337 = vmul.f32 %v1332, %v1332
        %v1338 = vsub.f32 %v1336, %v1337
        %v1339 = vsub.f32 %v1325, %v1332
        %v1340 = vadd.f32 %v1338, 1e-05
        %v1341 = vrsqrt.pop %v1340
        %v1342 = vmul.f32 %v1339, %v1341
        %v1344 = vlaneseq
        %v1345 = vshrl.u32 %v1344, 7
        %v1346 = vsub.s32 0, %v1345
        %v1347 = vrot.slane %v1328, %v1346
        %v1349 = vmul.f32 %v1342, %v1347
        %v1351 = vlaneseq
        %v1352 = vshrl.u32 %v1351, 7
        %v1353 = vsub.s32 0, %v1352
        %v1354 = vrot.slane %v1329, %v1353
        %v1356 = vadd.f32 %v1349, %v1354
        %v1357 = vld [vmem:[#allocation2] sm:$0xff]
        %1358 = vmatprep.subr.mxu0 0.0
        %1359 = vmatpush1.xpose.msra.mxu0 0.0
        %1360 = vmatprep.subr.mxu0 0.0
        %1361 = vmatpush1.xpose.msra.mxu0 0.0
        %1362 = vmatprep.subr.mxu0 0.0
        %1363 = vmatpush1.xpose.msra.mxu0 0.0
        %1364 = vmatprep.subr.mxu0 0.0
        %1365 = vmatpush1.xpose.msra.mxu0 0.0
        %1366 = vmatprep.subr.mxu0 0.0
        %1367 = vmatpush1.xpose.msra.mxu0 0.0
        %1368 = vmatprep.subr.mxu0 0.0
        %1369 = vmatpush1.xpose.msra.mxu0 0.0
        %1370 = vmatprep.subr.mxu0 0.0
        %1371 = vmatpush1.xpose.msra.mxu0 0.0
        %1372 = vmatprep.subr.mxu0 0.0
        %1373 = vmatpush1.xpose.msra.mxu0 0.0
        %1374 = vmatprep.subr.mxu0 0.0
        %1375 = vmatpush1.xpose.msra.mxu0 0.0
        %1376 = vmatprep.subr.mxu0 0.0
        %1377 = vmatpush1.xpose.msra.mxu0 0.0
        %1378 = vmatprep.subr.mxu0 0.0
        %1379 = vmatpush1.xpose.msra.mxu0 0.0
        %1380 = vmatprep.subr.mxu0 0.0
        %1381 = vmatpush1.xpose.msra.mxu0 0.0
        %1382 = vmatprep.subr.mxu0 0.0
        %1383 = vmatpush1.xpose.msra.mxu0 0.0
        %1384 = vmatprep.subr.mxu0 0.0
        %1385 = vmatpush1.xpose.msra.mxu0 0.0
        %1386 = vmatprep.subr.mxu0 0.0
        %1387 = vmatpush1.xpose.msra.mxu0 0.0
        %1388 = vmatprep.subr.mxu0 0.0
        %1389 = vmatpush1.xpose.msra.mxu0 %v1357
        %1390 = vmatprep.subr.mxu0 0.0
        %1391 = vmatpush2.xpose.msra.mxu0 0.0
        %1392 = vmatprep.subr.mxu0 0.0
        %1393 = vmatpush2.xpose.msra.mxu0 0.0
        %1394 = vmatprep.subr.mxu0 0.0
        %1395 = vmatpush2.xpose.msra.mxu0 0.0
        %1396 = vmatprep.subr.mxu0 0.0
        %1397 = vmatpush2.xpose.msra.mxu0 0.0
        %1398 = vmatprep.subr.mxu0 0.0
        %1399 = vmatpush2.xpose.msra.mxu0 0.0
        %1400 = vmatprep.subr.mxu0 0.0
        %1401 = vmatpush2.xpose.msra.mxu0 0.0
        %1402 = vmatprep.subr.mxu0 0.0
        %1403 = vmatpush2.xpose.msra.mxu0 0.0
        %1404 = vmatprep.subr.mxu0 0.0
        %1405 = vmatpush2.xpose.msra.mxu0 0.0
        %1406 = vmatprep.subr.mxu0 0.0
        %1407 = vmatpush2.xpose.msra.mxu0 0.0
        %1408 = vmatprep.subr.mxu0 0.0
        %1409 = vmatpush2.xpose.msra.mxu0 0.0
        %1410 = vmatprep.subr.mxu0 0.0
        %1411 = vmatpush2.xpose.msra.mxu0 0.0
        %1412 = vmatprep.subr.mxu0 0.0
        %1413 = vmatpush2.xpose.msra.mxu0 0.0
        %1414 = vmatprep.subr.mxu0 0.0
        %1415 = vmatpush2.xpose.msra.mxu0 0.0
        %1416 = vmatprep.subr.mxu0 0.0
        %1417 = vmatpush2.xpose.msra.mxu0 0.0
        %1418 = vmatprep.subr.mxu0 0.0
        %1419 = vmatpush2.xpose.msra.mxu0 0.0
        %1420 = vmatprep.subr.mxu0 0.0
        %1421 = vmatpush2.xpose.msra.mxu0 0.0
        %1422 = vmatprep.mubr.f32.mxu0 0.0
        %1423 = vmatmul.mubr.f32.gmra.mxu0 %v1234
        %v1424 = vpop.f32.mrf.mxu0
        %v1425 = vadd.f32 0.0, %v1424
        %v1426 = vpop.f32.mrf.mxu0
        %1427 = vdwg.mxu0
        %vm1428 = vcmask 64512
        %v1429 = vsel %vm1428, %v1425, -inf
        %1430 = vmax.xlane.f32.xlu0 %v1429
        %v1431 = vpop.xlane.xlu0 %1430
        %v1432 = vsub.f32 %v1425, %v1431
        %v1433 = vmul.f32 %v1432, 1.442695
        %v1434 = vpow.pop %v1433
        %v1435 = vsel %vm1428, %v1434, 0.0
        %1436 = vadd.xlane.f32.xlu0 %v1435
        %v1437 = vpop.xlane.xlu0 %1436
        %v1438 = vld [vmem:[#allocation3] sm:$0xff]
        %v1440 = vsel %vm1428, %v1434, 0
        %1442 = vmatprep.subr.mxu0 0.0
        %1443 = vmatpush1.msra.mxu0 0.0
        %1444 = vmatprep.subr.mxu0 0.0
        %1445 = vmatpush1.msra.mxu0 0.0
        %1446 = vmatprep.subr.mxu0 0.0
        %1447 = vmatpush1.msra.mxu0 0.0
        %1448 = vmatprep.subr.mxu0 0.0
        %1449 = vmatpush1.msra.mxu0 0.0
        %1450 = vmatprep.subr.mxu0 0.0
        %1451 = vmatpush1.msra.mxu0 0.0
        %1452 = vmatprep.subr.mxu0 0.0
        %1453 = vmatpush1.msra.mxu0 0.0
        %1454 = vmatprep.subr.mxu0 0.0
        %1455 = vmatpush1.msra.mxu0 0.0
        %1456 = vmatprep.subr.mxu0 0.0
        %1457 = vmatpush1.msra.mxu0 0.0
        %1458 = vmatprep.subr.mxu0 0.0
        %1459 = vmatpush1.msra.mxu0 0.0
        %1460 = vmatprep.subr.mxu0 0.0
        %1461 = vmatpush1.msra.mxu0 0.0
        %1462 = vmatprep.subr.mxu0 0.0
        %1463 = vmatpush1.msra.mxu0 0.0
        %1464 = vmatprep.subr.mxu0 0.0
        %1465 = vmatpush1.msra.mxu0 0.0
        %1466 = vmatprep.subr.mxu0 0.0
        %1467 = vmatpush1.msra.mxu0 0.0
        %1468 = vmatprep.subr.mxu0 0.0
        %1469 = vmatpush1.msra.mxu0 0.0
        %1470 = vmatprep.subr.mxu0 0.0
        %1471 = vmatpush1.msra.mxu0 0.0
        %1472 = vmatprep.subr.mxu0 0.0
        %1473 = vmatpush1.msra.mxu0 %v1438
        %1474 = vmatprep.subr.mxu0 0.0
        %1475 = vmatpush2.msra.mxu0 0.0
        %1476 = vmatprep.subr.mxu0 0.0
        %1477 = vmatpush2.msra.mxu0 0.0
        %1478 = vmatprep.subr.mxu0 0.0
        %1479 = vmatpush2.msra.mxu0 0.0
        %1480 = vmatprep.subr.mxu0 0.0
        %1481 = vmatpush2.msra.mxu0 0.0
        %1482 = vmatprep.subr.mxu0 0.0
        %1483 = vmatpush2.msra.mxu0 0.0
        %1484 = vmatprep.subr.mxu0 0.0
        %1485 = vmatpush2.msra.mxu0 0.0
        %1486 = vmatprep.subr.mxu0 0.0
        %1487 = vmatpush2.msra.mxu0 0.0
        %1488 = vmatprep.subr.mxu0 0.0
        %1489 = vmatpush2.msra.mxu0 0.0
        %1490 = vmatprep.subr.mxu0 0.0
        %1491 = vmatpush2.msra.mxu0 0.0
        %1492 = vmatprep.subr.mxu0 0.0
        %1493 = vmatpush2.msra.mxu0 0.0
        %1494 = vmatprep.subr.mxu0 0.0
        %1495 = vmatpush2.msra.mxu0 0.0
        %1496 = vmatprep.subr.mxu0 0.0
        %1497 = vmatpush2.msra.mxu0 0.0
        %1498 = vmatprep.subr.mxu0 0.0
        %1499 = vmatpush2.msra.mxu0 0.0
        %1500 = vmatprep.subr.mxu0 0.0
        %1501 = vmatpush2.msra.mxu0 0.0
        %1502 = vmatprep.subr.mxu0 0.0
        %1503 = vmatpush2.msra.mxu0 0.0
        %1504 = vmatprep.subr.mxu0 0.0
        %1505 = vmatpush2.msra.mxu0 0.0
        %1506 = vmatprep.mubr.f32.mxu0 0.0
        %1507 = vmatmul.mubr.f32.gmra.mxu0 %v1440
        %v1508 = vpop.f32.mrf.mxu0
        %v1509 = vadd.f32 0.0, %v1508
        %v1510 = vpop.f32.mrf.mxu0
        %1511 = vdwg.mxu0
        %v1512 = vrcp.pop %v1437
        %v1513 = vmul.f32 %v1509, %v1512
        %v1514 = vld [vmem:[#allocation4] sm:$0xff]
        %1515 = vmatprep.subr.mxu0 0.0
        %1516 = vmatpush1.xpose.msra.mxu0 0.0
        %1517 = vmatprep.subr.mxu0 0.0
        %1518 = vmatpush1.xpose.msra.mxu0 0.0
        %1519 = vmatprep.subr.mxu0 0.0
        %1520 = vmatpush1.xpose.msra.mxu0 0.0
        %1521 = vmatprep.subr.mxu0 0.0
        %1522 = vmatpush1.xpose.msra.mxu0 0.0
        %1523 = vmatprep.subr.mxu0 0.0
        %1524 = vmatpush1.xpose.msra.mxu0 0.0
        %1525 = vmatprep.subr.mxu0 0.0
        %1526 = vmatpush1.xpose.msra.mxu0 0.0
        %1527 = vmatprep.subr.mxu0 0.0
        %1528 = vmatpush1.xpose.msra.mxu0 0.0
        %1529 = vmatprep.subr.mxu0 0.0
        %1530 = vmatpush1.xpose.msra.mxu0 0.0
        %1531 = vmatprep.subr.mxu0 0.0
        %1532 = vmatpush1.xpose.msra.mxu0 0.0
        %1533 = vmatprep.subr.mxu0 0.0
        %1534 = vmatpush1.xpose.msra.mxu0 0.0
        %1535 = vmatprep.subr.mxu0 0.0
        %1536 = vmatpush1.xpose.msra.mxu0 0.0
        %1537 = vmatprep.subr.mxu0 0.0
        %1538 = vmatpush1.xpose.msra.mxu0 0.0
        %1539 = vmatprep.subr.mxu0 0.0
        %1540 = vmatpush1.xpose.msra.mxu0 0.0
        %1541 = vmatprep.subr.mxu0 0.0
        %1542 = vmatpush1.xpose.msra.mxu0 0.0
        %1543 = vmatprep.subr.mxu0 0.0
        %1544 = vmatpush1.xpose.msra.mxu0 0.0
        %1545 = vmatprep.subr.mxu0 0.0
        %1546 = vmatpush1.xpose.msra.mxu0 %v1514
        %1547 = vmatprep.subr.mxu0 0.0
        %1548 = vmatpush2.xpose.msra.mxu0 0.0
        %1549 = vmatprep.subr.mxu0 0.0
        %1550 = vmatpush2.xpose.msra.mxu0 0.0
        %1551 = vmatprep.subr.mxu0 0.0
        %1552 = vmatpush2.xpose.msra.mxu0 0.0
        %1553 = vmatprep.subr.mxu0 0.0
        %1554 = vmatpush2.xpose.msra.mxu0 0.0
        %1555 = vmatprep.subr.mxu0 0.0
        %1556 = vmatpush2.xpose.msra.mxu0 0.0
        %1557 = vmatprep.subr.mxu0 0.0
        %1558 = vmatpush2.xpose.msra.mxu0 0.0
        %1559 = vmatprep.subr.mxu0 0.0
        %1560 = vmatpush2.xpose.msra.mxu0 0.0
        %1561 = vmatprep.subr.mxu0 0.0
        %1562 = vmatpush2.xpose.msra.mxu0 0.0
        %1563 = vmatprep.subr.mxu0 0.0
        %1564 = vmatpush2.xpose.msra.mxu0 0.0
        %1565 = vmatprep.subr.mxu0 0.0
        %1566 = vmatpush2.xpose.msra.mxu0 0.0
        %1567 = vmatprep.subr.mxu0 0.0
        %1568 = vmatpush2.xpose.msra.mxu0 0.0
        %1569 = vmatprep.subr.mxu0 0.0
        %1570 = vmatpush2.xpose.msra.mxu0 0.0
        %1571 = vmatprep.subr.mxu0 0.0
        %1572 = vmatpush2.xpose.msra.mxu0 0.0
        %1573 = vmatprep.subr.mxu0 0.0
        %1574 = vmatpush2.xpose.msra.mxu0 0.0
        %1575 = vmatprep.subr.mxu0 0.0
        %1576 = vmatpush2.xpose.msra.mxu0 0.0
        %1577 = vmatprep.subr.mxu0 0.0
        %1578 = vmatpush2.xpose.msra.mxu0 0.0
        %1579 = vmatprep.mubr.f32.mxu0 0.0
        %1580 = vmatmul.mubr.f32.gmra.mxu0 %v1356
        %v1581 = vpop.f32.mrf.mxu0
        %v1582 = vadd.f32 0.0, %v1581
        %v1583 = vpop.f32.mrf.mxu0
        %1584 = vdwg.mxu0
        %v1585 = vsel %vm1428, %v1582, -inf
        %1586 = vmax.xlane.f32.xlu0 %v1585
        %v1587 = vpop.xlane.xlu0 %1586
        %v1588 = vsub.f32 %v1582, %v1587
        %v1589 = vmul.f32 %v1588, 1.442695
        %v1590 = vpow.pop %v1589
        %v1591 = vsel %vm1428, %v1590, 0.0
        %1592 = vadd.xlane.f32.xlu0 %v1591
        %v1593 = vpop.xlane.xlu0 %1592
        %v1594 = vld [vmem:[#allocation5] sm:$0xff]
        %v1596 = vsel %vm1428, %v1590, 0
        %1598 = vmatprep.subr.mxu0 0.0
        %1599 = vmatpush1.msra.mxu0 0.0
        %1600 = vmatprep.subr.mxu0 0.0
        %1601 = vmatpush1.msra.mxu0 0.0
        %1602 = vmatprep.subr.mxu0 0.0
        %1603 = vmatpush1.msra.mxu0 0.0
        %1604 = vmatprep.subr.mxu0 0.0
        %1605 = vmatpush1.msra.mxu0 0.0
        %1606 = vmatprep.subr.mxu0 0.0
        %1607 = vmatpush1.msra.mxu0 0.0
        %1608 = vmatprep.subr.mxu0 0.0
        %1609 = vmatpush1.msra.mxu0 0.0
        %1610 = vmatprep.subr.mxu0 0.0
        %1611 = vmatpush1.msra.mxu0 0.0
        %1612 = vmatprep.subr.mxu0 0.0
        %1613 = vmatpush1.msra.mxu0 0.0
        %1614 = vmatprep.subr.mxu0 0.0
        %1615 = vmatpush1.msra.mxu0 0.0
        %1616 = vmatprep.subr.mxu0 0.0
        %1617 = vmatpush1.msra.mxu0 0.0
        %1618 = vmatprep.subr.mxu0 0.0
        %1619 = vmatpush1.msra.mxu0 0.0
        %1620 = vmatprep.subr.mxu0 0.0
        %1621 = vmatpush1.msra.mxu0 0.0
        %1622 = vmatprep.subr.mxu0 0.0
        %1623 = vmatpush1.msra.mxu0 0.0
        %1624 = vmatprep.subr.mxu0 0.0
        %1625 = vmatpush1.msra.mxu0 0.0
        %1626 = vmatprep.subr.mxu0 0.0
        %1627 = vmatpush1.msra.mxu0 0.0
        %1628 = vmatprep.subr.mxu0 0.0
        %1629 = vmatpush1.msra.mxu0 %v1594
        %1630 = vmatprep.subr.mxu0 0.0
        %1631 = vmatpush2.msra.mxu0 0.0
        %1632 = vmatprep.subr.mxu0 0.0
        %1633 = vmatpush2.msra.mxu0 0.0
        %1634 = vmatprep.subr.mxu0 0.0
        %1635 = vmatpush2.msra.mxu0 0.0
        %1636 = vmatprep.subr.mxu0 0.0
        %1637 = vmatpush2.msra.mxu0 0.0
        %1638 = vmatprep.subr.mxu0 0.0
        %1639 = vmatpush2.msra.mxu0 0.0
        %1640 = vmatprep.subr.mxu0 0.0
        %1641 = vmatpush2.msra.mxu0 0.0
        %1642 = vmatprep.subr.mxu0 0.0
        %1643 = vmatpush2.msra.mxu0 0.0
        %1644 = vmatprep.subr.mxu0 0.0
        %1645 = vmatpush2.msra.mxu0 0.0
        %1646 = vmatprep.subr.mxu0 0.0
        %1647 = vmatpush2.msra.mxu0 0.0
        %1648 = vmatprep.subr.mxu0 0.0
        %1649 = vmatpush2.msra.mxu0 0.0
        %1650 = vmatprep.subr.mxu0 0.0
        %1651 = vmatpush2.msra.mxu0 0.0
        %1652 = vmatprep.subr.mxu0 0.0
        %1653 = vmatpush2.msra.mxu0 0.0
        %1654 = vmatprep.subr.mxu0 0.0
        %1655 = vmatpush2.msra.mxu0 0.0
        %1656 = vmatprep.subr.mxu0 0.0
        %1657 = vmatpush2.msra.mxu0 0.0
        %1658 = vmatprep.subr.mxu0 0.0
        %1659 = vmatpush2.msra.mxu0 0.0
        %1660 = vmatprep.subr.mxu0 0.0
        %1661 = vmatpush2.msra.mxu0 0.0
        %1662 = vmatprep.mubr.f32.mxu0 0.0
        %1663 = vmatmul.mubr.f32.gmra.mxu0 %v1596
        %v1664 = vpop.f32.mrf.mxu0
        %v1665 = vadd.f32 0.0, %v1664
        %v1666 = vpop.f32.mrf.mxu0
        %1667 = vdwg.mxu0
        %v1668 = vrcp.pop %v1593
        %v1669 = vmul.f32 %v1665, %v1668
        %v1670 = vld [vmem:[#allocation17] sm:$0xff]
        %v1671 = vld [vmem:[#allocation17 + $0x8] sm:$0xff]
        %v1672 = vld [vmem:[#allocation17 + $0x10] sm:$0xff]
        %v1673 = vld [vmem:[#allocation17 + $0x18] sm:$0xff]
        %v1674 = vld [vmem:[#allocation17 + $0x20] sm:$0xff]
        %v1675 = vld [vmem:[#allocation17 + $0x28] sm:$0xff]
        %v1676 = vld [vmem:[#allocation17 + $0x30] sm:$0xff]
        %v1677 = vld [vmem:[#allocation17 + $0x38] sm:$0xff]
        %v1678 = vld [vmem:[#allocation17 + $0x40] sm:$0xff]
        %v1679 = vld [vmem:[#allocation17 + $0x48] sm:$0xff]
        %v1680 = vld [vmem:[#allocation17 + $0x50] sm:$0xff]
        %v1681 = vld [vmem:[#allocation17 + $0x58] sm:$0xff]
        %v1682 = vld [vmem:[#allocation17 + $0x60] sm:$0xff]
        %v1683 = vld [vmem:[#allocation17 + $0x68] sm:$0xff]
        %v1684 = vld [vmem:[#allocation17 + $0x70] sm:$0xff]
        %v1685 = vld [vmem:[#allocation17 + $0x78] sm:$0xff]
        %v1686 = vld [vmem:[#allocation18] sm:$0xff]
        %v1687 = vld [vmem:[#allocation18 + $0x8] sm:$0xff]
        %v1688 = vld [vmem:[#allocation18 + $0x10] sm:$0xff]
        %v1689 = vld [vmem:[#allocation18 + $0x18] sm:$0xff]
        %v1690 = vld [vmem:[#allocation18 + $0x20] sm:$0xff]
        %v1691 = vld [vmem:[#allocation18 + $0x28] sm:$0xff]
        %v1692 = vld [vmem:[#allocation18 + $0x30] sm:$0xff]
        %v1693 = vld [vmem:[#allocation18 + $0x38] sm:$0xff]
        %v1694 = vld [vmem:[#allocation18 + $0x40] sm:$0xff]
        %v1695 = vld [vmem:[#allocation18 + $0x48] sm:$0xff]
        %v1696 = vld [vmem:[#allocation18 + $0x50] sm:$0xff]
        %v1697 = vld [vmem:[#allocation18 + $0x58] sm:$0xff]
        %v1698 = vld [vmem:[#allocation18 + $0x60] sm:$0xff]
        %v1699 = vld [vmem:[#allocation18 + $0x68] sm:$0xff]
        %v1700 = vld [vmem:[#allocation18 + $0x70] sm:$0xff]
        %v1701 = vld [vmem:[#allocation18 + $0x78] sm:$0xff]
        %1702 = vmatprep.subr.mxu0 0.0
        %1703 = vmatpush1.msra.mxu0 %v1701
        %1704 = vmatprep.subr.mxu0 0.0
        %1705 = vmatpush1.msra.mxu0 %v1700
        %1706 = vmatprep.subr.mxu0 0.0
        %1707 = vmatpush1.msra.mxu0 %v1699
        %1708 = vmatprep.subr.mxu0 0.0
        %1709 = vmatpush1.msra.mxu0 %v1698
        %1710 = vmatprep.subr.mxu0 0.0
        %1711 = vmatpush1.msra.mxu0 %v1697
        %1712 = vmatprep.subr.mxu0 0.0
        %1713 = vmatpush1.msra.mxu0 %v1696
        %1714 = vmatprep.subr.mxu0 0.0
        %1715 = vmatpush1.msra.mxu0 %v1695
        %1716 = vmatprep.subr.mxu0 0.0
        %1717 = vmatpush1.msra.mxu0 %v1694
        %1718 = vmatprep.subr.mxu0 0.0
        %1719 = vmatpush1.msra.mxu0 %v1693
        %1720 = vmatprep.subr.mxu0 0.0
        %1721 = vmatpush1.msra.mxu0 %v1692
        %1722 = vmatprep.subr.mxu0 0.0
        %1723 = vmatpush1.msra.mxu0 %v1691
        %1724 = vmatprep.subr.mxu0 0.0
        %1725 = vmatpush1.msra.mxu0 %v1690
        %1726 = vmatprep.subr.mxu0 0.0
        %1727 = vmatpush1.msra.mxu0 %v1689
        %1728 = vmatprep.subr.mxu0 0.0
        %1729 = vmatpush1.msra.mxu0 %v1688
        %1730 = vmatprep.subr.mxu0 0.0
        %1731 = vmatpush1.msra.mxu0 %v1687
        %1732 = vmatprep.subr.mxu0 0.0
        %1733 = vmatpush1.msra.mxu0 %v1686
        %1734 = vmatprep.subr.mxu0 0.0
        %1735 = vmatpush2.msra.mxu0 0.0
        %1736 = vmatprep.subr.mxu0 0.0
        %1737 = vmatpush2.msra.mxu0 0.0
        %1738 = vmatprep.subr.mxu0 0.0
        %1739 = vmatpush2.msra.mxu0 0.0
        %1740 = vmatprep.subr.mxu0 0.0
        %1741 = vmatpush2.msra.mxu0 0.0
        %1742 = vmatprep.subr.mxu0 0.0
        %1743 = vmatpush2.msra.mxu0 0.0
        %1744 = vmatprep.subr.mxu0 0.0
        %1745 = vmatpush2.msra.mxu0 0.0
        %1746 = vmatprep.subr.mxu0 0.0
        %1747 = vmatpush2.msra.mxu0 0.0
        %1748 = vmatprep.subr.mxu0 0.0
        %1749 = vmatpush2.msra.mxu0 0.0
        %1750 = vmatprep.subr.mxu0 0.0
        %1751 = vmatpush2.msra.mxu0 0.0
        %1752 = vmatprep.subr.mxu0 0.0
        %1753 = vmatpush2.msra.mxu0 0.0
        %1754 = vmatprep.subr.mxu0 0.0
        %1755 = vmatpush2.msra.mxu0 0.0
        %1756 = vmatprep.subr.mxu0 0.0
        %1757 = vmatpush2.msra.mxu0 0.0
        %1758 = vmatprep.subr.mxu0 0.0
        %1759 = vmatpush2.msra.mxu0 0.0
        %1760 = vmatprep.subr.mxu0 0.0
        %1761 = vmatpush2.msra.mxu0 0.0
        %1762 = vmatprep.subr.mxu0 0.0
        %1763 = vmatpush2.msra.mxu0 0.0
        %1764 = vmatprep.subr.mxu0 0.0
        %1765 = vmatpush2.msra.mxu0 0.0
        %1766 = vmatprep.mubr.f32.mxu0 0.0
        %1767 = vmatmul.mubr.f32.gmra.mxu0 %v1669
        %v1768 = vpop.f32.mrf.mxu0
        %v1769 = vadd.f32 0.0, %v1768
        %v1770 = vpop.f32.mrf.mxu0
        %1771 = vdwg.mxu0
        %1772 = vmatprep.subr.mxu0 0.0
        %1773 = vmatpush1.msra.mxu0 %v1685
        %1774 = vmatprep.subr.mxu0 0.0
        %1775 = vmatpush1.msra.mxu0 %v1684
        %1776 = vmatprep.subr.mxu0 0.0
        %1777 = vmatpush1.msra.mxu0 %v1683
        %1778 = vmatprep.subr.mxu0 0.0
        %1779 = vmatpush1.msra.mxu0 %v1682
        %1780 = vmatprep.subr.mxu0 0.0
        %1781 = vmatpush1.msra.mxu0 %v1681
        %1782 = vmatprep.subr.mxu0 0.0
        %1783 = vmatpush1.msra.mxu0 %v1680
        %1784 = vmatprep.subr.mxu0 0.0
        %1785 = vmatpush1.msra.mxu0 %v1679
        %1786 = vmatprep.subr.mxu0 0.0
        %1787 = vmatpush1.msra.mxu0 %v1678
        %1788 = vmatprep.subr.mxu0 0.0
        %1789 = vmatpush1.msra.mxu0 %v1677
        %1790 = vmatprep.subr.mxu0 0.0
        %1791 = vmatpush1.msra.mxu0 %v1676
        %1792 = vmatprep.subr.mxu0 0.0
        %1793 = vmatpush1.msra.mxu0 %v1675
        %1794 = vmatprep.subr.mxu0 0.0
        %1795 = vmatpush1.msra.mxu0 %v1674
        %1796 = vmatprep.subr.mxu0 0.0
        %1797 = vmatpush1.msra.mxu0 %v1673
        %1798 = vmatprep.subr.mxu0 0.0
        %1799 = vmatpush1.msra.mxu0 %v1672
        %1800 = vmatprep.subr.mxu0 0.0
        %1801 = vmatpush1.msra.mxu0 %v1671
        %1802 = vmatprep.subr.mxu0 0.0
        %1803 = vmatpush1.msra.mxu0 %v1670
        %1804 = vmatprep.subr.mxu0 0.0
        %1805 = vmatpush2.msra.mxu0 0.0
        %1806 = vmatprep.subr.mxu0 0.0
        %1807 = vmatpush2.msra.mxu0 0.0
        %1808 = vmatprep.subr.mxu0 0.0
        %1809 = vmatpush2.msra.mxu0 0.0
        %1810 = vmatprep.subr.mxu0 0.0
        %1811 = vmatpush2.msra.mxu0 0.0
        %1812 = vmatprep.subr.mxu0 0.0
        %1813 = vmatpush2.msra.mxu0 0.0
        %1814 = vmatprep.subr.mxu0 0.0
        %1815 = vmatpush2.msra.mxu0 0.0
        %1816 = vmatprep.subr.mxu0 0.0
        %1817 = vmatpush2.msra.mxu0 0.0
        %1818 = vmatprep.subr.mxu0 0.0
        %1819 = vmatpush2.msra.mxu0 0.0
        %1820 = vmatprep.subr.mxu0 0.0
        %1821 = vmatpush2.msra.mxu0 0.0
        %1822 = vmatprep.subr.mxu0 0.0
        %1823 = vmatpush2.msra.mxu0 0.0
        %1824 = vmatprep.subr.mxu0 0.0
        %1825 = vmatpush2.msra.mxu0 0.0
        %1826 = vmatprep.subr.mxu0 0.0
        %1827 = vmatpush2.msra.mxu0 0.0
        %1828 = vmatprep.subr.mxu0 0.0
        %1829 = vmatpush2.msra.mxu0 0.0
        %1830 = vmatprep.subr.mxu0 0.0
        %1831 = vmatpush2.msra.mxu0 0.0
        %1832 = vmatprep.subr.mxu0 0.0
        %1833 = vmatpush2.msra.mxu0 0.0
        %1834 = vmatprep.subr.mxu0 0.0
        %1835 = vmatpush2.msra.mxu0 0.0
        %1836 = vmatprep.mubr.f32.mxu0 0.0
        %1837 = vmatmul.mubr.f32.gmra.mxu0 %v1513
        %v1838 = vpop.f32.mrf.mxu0
        %v1839 = vadd.f32 %v1769, %v1838
        %v1840 = vpop.f32.mrf.mxu0
        %1841 = vdwg.mxu0
        %v1842 = vld [vmem:[%s12] sm:$0x1]
        %v1844 = vlaneseq
        %v1845 = vshrl.u32 %v1844, 7
        %v1846 = vsub.s32 0, %v1845
        %v1847 = vrot.slane %v1842, %v1846
        %v1849 = vadd.f32 %v1839, %v1847
        %1850 = vst [vmem:[%s809] sm:$0xff] %v1849
        %s1851 = sand.u32 %s517, 1
        %s1852 = scalar_lea.sflag [#allocation8], %s1851
        %s1853 = sand.u32 %s517, 1
        %s1854 = smul.addr %s1853, 8
        %s1855 = scalar_lea.vmem [#allocation20], %s1854
        // Predicated region
        $region141: #{tpu_custom_call.1} parent=103 // pred_check
          %p1856 = pneg %p527
        $region142: #{tpu_custom_call.1} parent=103 // pred_check_branch
          %1858 = sbr.rel (%p1856) target = $region144
        $region143: #{tpu_custom_call.1} parent=103 // pred_region
          %s1860 = ssub.s32 128, 128
          %1861 = vsyncadd %s1852, %s1860
          %s1862 = sadd.s32 %s49, %s48
          %s1863 = smul.addr %s1862, 128
          %s1864 = scalar_lea.hbm %s21, %s1863
          %s1866 = sshll.u32 %s1855, 4
          %s1867 = int_to_ptr.vmem [resolvable:$true] %s1866
          %1869 = dma.vmem_to_hbm [thread:$0]  %s1867, 128, %s1864, %s1852
        $region144: #{tpu_custom_call.1} parent=103 // pred_fallthru
          _
      $region104: #{tpu_custom_call.1} parent=5 // pred_fallthru
        _
      %p1870 = scmp.le.s32.totalorder 2, %s39
      // Predicated region
      $region145: #{tpu_custom_call.1} parent=5 // pred_check
        %p1871 = pneg %p1870
      $region146: #{tpu_custom_call.1} parent=5 // pred_check_branch
        %1873 = sbr.rel (%p1871) target = $region148
      $region147: #{tpu_custom_call.1} parent=5 // pred_region
        %s1874 = ssub.s32 %s39, 2
        // Predicated region
        $region149: #{tpu_custom_call.1} parent=147 // pred_check
          %p1875 = pneg %p533
        $region150: #{tpu_custom_call.1} parent=147 // pred_check_branch
          %1877 = sbr.rel (%p1875) target = $region152
        $region151: #{tpu_custom_call.1} parent=147 // pred_region
          %s1878 = sand.u32 %s518, 1
          %s1879 = scalar_lea.sflag [#allocation8], %s1878
          %s1880 = sand.u32 %s518, 1
          %s1881 = smul.addr %s1880, 8
          %s1882 = scalar_lea.vmem [#allocation20], %s1881
          %1883 = dma.done %s1879, 128
        $region152: #{tpu_custom_call.1} parent=147 // pred_fallthru
          _
      $region148: #{tpu_custom_call.1} parent=5 // pred_fallthru
        _
    $region6: #{tpu_custom_call.1} parent=1 // loop_footer
      %s43 = sadd.s32 1, %s39
    $region7: #{tpu_custom_call.1} parent=1 // loop_footer_branch
      %38 = sbr.rel target = $region3
    $region8: #{tpu_custom_call.1} parent=1 // loop_exit
      _
    %1884 = vsyncpa [#allocation7], 1
    %s1885 = scalar_lea.sflag [#allocation7], 1
    %1886 = vsyncpa %s1885, 1
    %1887 = vsyncpa [#allocation10], 1
    %s1888 = scalar_lea.sflag [#allocation10], 1
    %1889 = vsyncpa %s1888, 1
    %1890 = vsyncpa [#allocation13], 1
    %1891 = vsyncpa [#allocation16], 1
    %1892 = vsyncpa [#allocation19], 1
    %1893 = vsyncpa [#allocation8], 1
    %s1894 = scalar_lea.sflag [#allocation8], 1
    %1895 = vsyncpa %s1894, 1

</llo_original>
